<compile_context>
chip_gen: v7x
topology: tpu7x:2x2x1
jax: 0.10.0
libtpu: 0.0.40
codegen_flags: <defaults>
</compile_context>

<pallas_src>
import functools

import jax
import jax.numpy as jnp
from jax import lax
from jax.experimental import pallas as pl
from jax.experimental.pallas import tpu as pltpu


def _drqn_kernel(x_ref, wih_ref, whh_ref, bg_ref, w1_ref, b1_ref, w2_ref, b2_ref,
                 out_ref, *, seq_len, batch, hidden_size):
    # x_ref:  (T*B, I)    flattened, time-major
    # out_ref:(T*B, O_pad) lane-dense padded output
    T, B, H = seq_len, batch, hidden_size

    whh = whh_ref[...]                                   # (H, 4H)

    # ---- (1) Hoisted input projection: one matmul for all timesteps. ----
    # Kept entirely in vregs (T*B=64 rows x 4H=64 lanes of f32 = 4 vregs).
    gx = jnp.dot(x_ref[...], wih_ref[...],
                 preferred_element_type=jnp.float32) + bg_ref[...]   # (T*B, 4H)

    # ---- (2) Recurrence: only h @ w_hh stays inside the (static) loop. ----
    # Gate order is [i, f, o, g] -> single sigmoid over the first 3H lanes.
    h = jnp.zeros((B, H), jnp.float32)
    c = jnp.zeros((B, H), jnp.float32)
    h_steps = []
    for t in range(T):                                   # static offsets, fully unrolled
        gates = gx[t * B:(t + 1) * B, :] + jnp.dot(
            h, whh, preferred_element_type=jnp.float32)  # (B, 4H)
        sig = jax.nn.sigmoid(gates[:, :3 * H])           # i | f | o in one EUP pass
        i_g = sig[:, 0 * H:1 * H]
        f_g = sig[:, 1 * H:2 * H]
        o_g = sig[:, 2 * H:3 * H]
        g_g = jnp.tanh(gates[:, 3 * H:4 * H])
        c = f_g * c + i_g * g_g
        h = o_g * jnp.tanh(c)
        h_steps.append(h)

    hs = jnp.concatenate(h_steps, axis=0)                # (T*B, H), stays in vregs

    # ---- (3) Hoisted FC layers: two matmuls + ONE lane-dense output store. ----
    hid = jnp.maximum(
        jnp.dot(hs, w1_ref[...], preferred_element_type=jnp.float32)
        + b1_ref[...], 0.0)                              # (T*B, 64)
    out_ref[...] = jnp.dot(hid, w2_ref[...],
                           preferred_element_type=jnp.float32) + b2_ref[...]


def drqn_forward(x, params, *, hidden_size, num_outputs):
    """x: (B, T, I) or (T, I).  Returns q-values (B, T, num_outputs), float32."""
    # TODO(synk): optional initial (h, c) carry-in / final-state carry-out is not
    # implemented; we match the PyTorch default hidden=None (zero init).
    if x.ndim == 2:
        x = x[None]                       # matches torch: x.unsqueeze(0)
    B, T, I = x.shape
    H = hidden_size

    w_ih, w_hh, b_ih, b_hh, w1, b1, w2, b2 = params

    # PyTorch gate row order is [i, f, g, o]; permute to [i, f, o, g] so the
    # kernel can do one sigmoid over the first 3H columns.
    def _reorder(w):                      # w: (4H, ...) or (4H,)
        return jnp.concatenate([w[:2 * H], w[3 * H:4 * H], w[2 * H:3 * H]], axis=0)

    wih_t = _reorder(w_ih).T                              # (I, 4H)
    whh_t = _reorder(w_hh).T                              # (H, 4H)
    bg = _reorder(b_ih + b_hh)[None, :]                   # (1, 4H)
    w1_t = w1.T                                           # (H, 64)
    b1r = b1[None, :]                                     # (1, 64)

    # Lane-dense output: pad the fc2 output dim to 128 with zero columns.
    O_pad = 128
    w2_t = jnp.pad(w2.T, ((0, 0), (0, O_pad - num_outputs)))   # (64, 128)
    b2r = jnp.pad(b2, (0, O_pad - num_outputs))[None, :]       # (1, 128)

    # Pad batch to a multiple of 8 (vreg sublanes / MXU rows). Padded rows are
    # garbage-but-harmless and are sliced off below.
    B_pad = max(8, ((B + 7) // 8) * 8)
    x_tbi = jnp.transpose(x.astype(jnp.float32), (1, 0, 2))    # (T, B, I)
    if B_pad != B:
        x_tbi = jnp.pad(x_tbi, ((0, 0), (0, B_pad - B), (0, 0)))
    x_flat = x_tbi.reshape(T * B_pad, I)                       # (T*B, I) wrapper-side

    # TODO(synk): if T/B/H are scaled up (e.g. T*B*4H f32 approaching v7x's
    # 64 MiB VMEM), compute gx in T-chunks / keep x in HBM with manual DMA.
    vmem = pl.BlockSpec(memory_space=pltpu.MemorySpace.VMEM)
    kernel = functools.partial(_drqn_kernel, seq_len=T, batch=B_pad,
                               hidden_size=H)

    out_flat = pl.pallas_call(
        kernel,
        out_shape=jax.ShapeDtypeStruct((T * B_pad, O_pad), jnp.float32),
        in_specs=[vmem] * 8,
        out_specs=vmem,
    )(x_flat, wih_t, whh_t, bg, w1_t, b1r, w2_t, b2r)

    out_tbo = out_flat.reshape(T, B_pad, O_pad)[:, :B, :num_outputs]
    return jnp.transpose(out_tbo, (1, 0, 2))                   # (B, T, O)


def _reference_forward(x, params, *, hidden_size, num_outputs):
    """Pure-JAX reference mirroring PyTorch semantics, for validation."""
    if x.ndim == 2:
        x = x[None]
    w_ih, w_hh, b_ih, b_hh, w1, b1, w2, b2 = params
    B, T, I = x.shape
    H = hidden_size

    def cell(carry, x_t):
        h, c = carry
        gates = x_t @ w_ih.T + b_ih + h @ w_hh.T + b_hh
        i_g = jax.nn.sigmoid(gates[:, 0 * H:1 * H])
        f_g = jax.nn.sigmoid(gates[:, 1 * H:2 * H])
        g_g = jnp.tanh(gates[:, 2 * H:3 * H])
        o_g = jax.nn.sigmoid(gates[:, 3 * H:4 * H])
        c_new = f_g * c + i_g * g_g
        h_new = o_g * jnp.tanh(c_new)
        return (h_new, c_new), h_new

    h0 = jnp.zeros((B, H), jnp.float32)
    c0 = jnp.zeros((B, H), jnp.float32)
    _, hs = lax.scan(cell, (h0, c0), jnp.swapaxes(x, 0, 1))
    out = jnp.swapaxes(hs, 0, 1)                      # (B, T, H)
    hid = jnp.maximum(out @ w1.T + b1, 0.0)
    return hid @ w2.T + b2


def init_params(key, num_inputs, num_outputs, hidden_size):
    ks = jax.random.split(key, 8)
    H4 = 4 * hidden_size
    scale = 0.1
    w_ih = scale * jax.random.normal(ks[0], (H4, num_inputs), jnp.float32)
    w_hh = scale * jax.random.normal(ks[1], (H4, hidden_size), jnp.float32)
    b_ih = scale * jax.random.normal(ks[2], (H4,), jnp.float32)
    b_hh = scale * jax.random.normal(ks[3], (H4,), jnp.float32)
    w1 = scale * jax.random.normal(ks[4], (64, hidden_size), jnp.float32)
    b1 = scale * jax.random.normal(ks[5], (64,), jnp.float32)
    w2 = scale * jax.random.normal(ks[6], (num_outputs, 64), jnp.float32)
    b2 = scale * jax.random.normal(ks[7], (num_outputs,), jnp.float32)
    return (w_ih, w_hh, b_ih, b_hh, w1, b1, w2, b2)


if __name__ == "__main__":
    num_inputs, num_outputs, hidden_size = 4, 2, 16
    B, T = 2, 8

    key = jax.random.PRNGKey(0)
    kx, kp = jax.random.split(key)
    x = jax.random.normal(kx, (B, T, num_inputs), jnp.float32)
    params = init_params(kp, num_inputs, num_outputs, hidden_size)

    q = drqn_forward(x, params, hidden_size=hidden_size, num_outputs=num_outputs)
    q = jax.block_until_ready(q)

    q_ref = _reference_forward(x, params, hidden_size=hidden_size,
                               num_outputs=num_outputs)
    assert q.shape == (B, T, num_outputs)
    assert jnp.allclose(q, q_ref, rtol=1e-4, atol=1e-4), "mismatch vs reference"

    print("KERNEL_OK")
</pallas_src>

<mosaic_0001>
module attributes {stable_mosaic.version = 11 : i64} {
  func.func @_drqn_kernel(%arg0: memref<64x4xf32, #tpu.memory_space<vmem>>, %arg1: memref<4x64xf32, #tpu.memory_space<vmem>>, %arg2: memref<16x64xf32, #tpu.memory_space<vmem>>, %arg3: memref<1x64xf32, #tpu.memory_space<vmem>>, %arg4: memref<16x64xf32, #tpu.memory_space<vmem>>, %arg5: memref<1x64xf32, #tpu.memory_space<vmem>>, %arg6: memref<64x128xf32, #tpu.memory_space<vmem>>, %arg7: memref<1x128xf32, #tpu.memory_space<vmem>>, %arg8: memref<64x128xf32, #tpu.memory_space<vmem>>) attributes {dimension_semantics = [], scalar_prefetch = 0 : i64, scratch_operands = 0 : i64, tpu.core_type = #tpu.core_type<tc>} {
    %c0 = arith.constant 0 : index
    %c0_0 = arith.constant 0 : index
    %0 = vector.load %arg2[%c0, %c0_0] : memref<16x64xf32, #tpu.memory_space<vmem>>, vector<16x64xf32>
    %c0_1 = arith.constant 0 : index
    %c0_2 = arith.constant 0 : index
    %1 = vector.load %arg0[%c0_1, %c0_2] : memref<64x4xf32, #tpu.memory_space<vmem>>, vector<64x4xf32>
    %c0_3 = arith.constant 0 : index
    %c0_4 = arith.constant 0 : index
    %2 = vector.load %arg1[%c0_3, %c0_4] : memref<4x64xf32, #tpu.memory_space<vmem>>, vector<4x64xf32>
    %cst = arith.constant dense<0.000000e+00> : vector<64x64xf32>
    %3 = tpu.matmul %1, %2, %cst {dimension_numbers = #tpu.dot_dimension_numbers<[1], [0], [0], [1], [0, 0, 1, 1], [], []>} : vector<64x4xf32>, vector<4x64xf32>, vector<64x64xf32> -> vector<64x64xf32>
    %c0_5 = arith.constant 0 : index
    %c0_6 = arith.constant 0 : index
    %4 = vector.load %arg3[%c0_5, %c0_6] : memref<1x64xf32, #tpu.memory_space<vmem>>, vector<1x64xf32>
    %5 = vector.broadcast %4 : vector<1x64xf32> to vector<64x64xf32>
    %6 = arith.addf %3, %5 : vector<64x64xf32>
    %cst_7 = arith.constant 0.000000e+00 : f32
    %7 = vector.broadcast %cst_7 : f32 to vector<8x16xf32>
    %cst_8 = arith.constant 0.000000e+00 : f32
    %8 = vector.broadcast %cst_8 : f32 to vector<8x16xf32>
    %9 = vector.extract_strided_slice %6 {offsets = [0, 0], sizes = [8, 64], strides = [1, 1]} : vector<64x64xf32> to vector<8x64xf32>
    %cst_9 = arith.constant dense<0.000000e+00> : vector<8x64xf32>
    %10 = tpu.matmul %7, %0, %cst_9 {dimension_numbers = #tpu.dot_dimension_numbers<[1], [0], [0], [1], [0, 0, 1, 1], [], []>} : vector<8x16xf32>, vector<16x64xf32>, vector<8x64xf32> -> vector<8x64xf32>
    %11 = arith.addf %9, %10 : vector<8x64xf32>
    %12 = vector.extract_strided_slice %11 {offsets = [0, 0], sizes = [8, 48], strides = [1, 1]} : vector<8x64xf32> to vector<8x48xf32>
    %13 = arith.negf %12 : vector<8x48xf32>
    %14 = math.exp %13 : vector<8x48xf32>
    %cst_10 = arith.constant 1.000000e+00 : f32
    %15 = vector.broadcast %cst_10 : f32 to vector<8x48xf32>
    %16 = arith.addf %15, %14 : vector<8x48xf32>
    %17 = arith.divf %15, %16 : vector<8x48xf32>
    %18 = vector.extract_strided_slice %17 {offsets = [0, 0], sizes = [8, 16], strides = [1, 1]} : vector<8x48xf32> to vector<8x16xf32>
    %19 = vector.extract_strided_slice %17 {offsets = [0, 16], sizes = [8, 16], strides = [1, 1]} : vector<8x48xf32> to vector<8x16xf32>
    %20 = vector.extract_strided_slice %17 {offsets = [0, 32], sizes = [8, 16], strides = [1, 1]} : vector<8x48xf32> to vector<8x16xf32>
    %21 = vector.extract_strided_slice %11 {offsets = [0, 48], sizes = [8, 16], strides = [1, 1]} : vector<8x64xf32> to vector<8x16xf32>
    %22 = math.tanh %21 : vector<8x16xf32>
    %23 = arith.mulf %19, %8 : vector<8x16xf32>
    %24 = arith.mulf %18, %22 : vector<8x16xf32>
    %25 = arith.addf %23, %24 : vector<8x16xf32>
    %26 = math.tanh %25 : vector<8x16xf32>
    %27 = arith.mulf %20, %26 : vector<8x16xf32>
    %28 = vector.extract_strided_slice %6 {offsets = [8, 0], sizes = [8, 64], strides = [1, 1]} : vector<64x64xf32> to vector<8x64xf32>
    %cst_11 = arith.constant dense<0.000000e+00> : vector<8x64xf32>
    %29 = tpu.matmul %27, %0, %cst_11 {dimension_numbers = #tpu.dot_dimension_numbers<[1], [0], [0], [1], [0, 0, 1, 1], [], []>} : vector<8x16xf32>, vector<16x64xf32>, vector<8x64xf32> -> vector<8x64xf32>
    %30 = arith.addf %28, %29 : vector<8x64xf32>
    %31 = vector.extract_strided_slice %30 {offsets = [0, 0], sizes = [8, 48], strides = [1, 1]} : vector<8x64xf32> to vector<8x48xf32>
    %32 = arith.negf %31 : vector<8x48xf32>
    %33 = math.exp %32 : vector<8x48xf32>
    %cst_12 = arith.constant 1.000000e+00 : f32
    %34 = vector.broadcast %cst_12 : f32 to vector<8x48xf32>
    %35 = arith.addf %34, %33 : vector<8x48xf32>
    %36 = arith.divf %34, %35 : vector<8x48xf32>
    %37 = vector.extract_strided_slice %36 {offsets = [0, 0], sizes = [8, 16], strides = [1, 1]} : vector<8x48xf32> to vector<8x16xf32>
    %38 = vector.extract_strided_slice %36 {offsets = [0, 16], sizes = [8, 16], strides = [1, 1]} : vector<8x48xf32> to vector<8x16xf32>
    %39 = vector.extract_strided_slice %36 {offsets = [0, 32], sizes = [8, 16], strides = [1, 1]} : vector<8x48xf32> to vector<8x16xf32>
    %40 = vector.extract_strided_slice %30 {offsets = [0, 48], sizes = [8, 16], strides = [1, 1]} : vector<8x64xf32> to vector<8x16xf32>
    %41 = math.tanh %40 : vector<8x16xf32>
    %42 = arith.mulf %38, %25 : vector<8x16xf32>
    %43 = arith.mulf %37, %41 : vector<8x16xf32>
    %44 = arith.addf %42, %43 : vector<8x16xf32>
    %45 = math.tanh %44 : vector<8x16xf32>
    %46 = arith.mulf %39, %45 : vector<8x16xf32>
    %47 = vector.extract_strided_slice %6 {offsets = [16, 0], sizes = [8, 64], strides = [1, 1]} : vector<64x64xf32> to vector<8x64xf32>
    %cst_13 = arith.constant dense<0.000000e+00> : vector<8x64xf32>
    %48 = tpu.matmul %46, %0, %cst_13 {dimension_numbers = #tpu.dot_dimension_numbers<[1], [0], [0], [1], [0, 0, 1, 1], [], []>} : vector<8x16xf32>, vector<16x64xf32>, vector<8x64xf32> -> vector<8x64xf32>
    %49 = arith.addf %47, %48 : vector<8x64xf32>
    %50 = vector.extract_strided_slice %49 {offsets = [0, 0], sizes = [8, 48], strides = [1, 1]} : vector<8x64xf32> to vector<8x48xf32>
    %51 = arith.negf %50 : vector<8x48xf32>
    %52 = math.exp %51 : vector<8x48xf32>
    %cst_14 = arith.constant 1.000000e+00 : f32
    %53 = vector.broadcast %cst_14 : f32 to vector<8x48xf32>
    %54 = arith.addf %53, %52 : vector<8x48xf32>
    %55 = arith.divf %53, %54 : vector<8x48xf32>
    %56 = vector.extract_strided_slice %55 {offsets = [0, 0], sizes = [8, 16], strides = [1, 1]} : vector<8x48xf32> to vector<8x16xf32>
    %57 = vector.extract_strided_slice %55 {offsets = [0, 16], sizes = [8, 16], strides = [1, 1]} : vector<8x48xf32> to vector<8x16xf32>
    %58 = vector.extract_strided_slice %55 {offsets = [0, 32], sizes = [8, 16], strides = [1, 1]} : vector<8x48xf32> to vector<8x16xf32>
    %59 = vector.extract_strided_slice %49 {offsets = [0, 48], sizes = [8, 16], strides = [1, 1]} : vector<8x64xf32> to vector<8x16xf32>
    %60 = math.tanh %59 : vector<8x16xf32>
    %61 = arith.mulf %57, %44 : vector<8x16xf32>
    %62 = arith.mulf %56, %60 : vector<8x16xf32>
    %63 = arith.addf %61, %62 : vector<8x16xf32>
    %64 = math.tanh %63 : vector<8x16xf32>
    %65 = arith.mulf %58, %64 : vector<8x16xf32>
    %66 = vector.extract_strided_slice %6 {offsets = [24, 0], sizes = [8, 64], strides = [1, 1]} : vector<64x64xf32> to vector<8x64xf32>
    %cst_15 = arith.constant dense<0.000000e+00> : vector<8x64xf32>
    %67 = tpu.matmul %65, %0, %cst_15 {dimension_numbers = #tpu.dot_dimension_numbers<[1], [0], [0], [1], [0, 0, 1, 1], [], []>} : vector<8x16xf32>, vector<16x64xf32>, vector<8x64xf32> -> vector<8x64xf32>
    %68 = arith.addf %66, %67 : vector<8x64xf32>
    %69 = vector.extract_strided_slice %68 {offsets = [0, 0], sizes = [8, 48], strides = [1, 1]} : vector<8x64xf32> to vector<8x48xf32>
    %70 = arith.negf %69 : vector<8x48xf32>
    %71 = math.exp %70 : vector<8x48xf32>
    %cst_16 = arith.constant 1.000000e+00 : f32
    %72 = vector.broadcast %cst_16 : f32 to vector<8x48xf32>
    %73 = arith.addf %72, %71 : vector<8x48xf32>
    %74 = arith.divf %72, %73 : vector<8x48xf32>
    %75 = vector.extract_strided_slice %74 {offsets = [0, 0], sizes = [8, 16], strides = [1, 1]} : vector<8x48xf32> to vector<8x16xf32>
    %76 = vector.extract_strided_slice %74 {offsets = [0, 16], sizes = [8, 16], strides = [1, 1]} : vector<8x48xf32> to vector<8x16xf32>
    %77 = vector.extract_strided_slice %74 {offsets = [0, 32], sizes = [8, 16], strides = [1, 1]} : vector<8x48xf32> to vector<8x16xf32>
    %78 = vector.extract_strided_slice %68 {offsets = [0, 48], sizes = [8, 16], strides = [1, 1]} : vector<8x64xf32> to vector<8x16xf32>
    %79 = math.tanh %78 : vector<8x16xf32>
    %80 = arith.mulf %76, %63 : vector<8x16xf32>
    %81 = arith.mulf %75, %79 : vector<8x16xf32>
    %82 = arith.addf %80, %81 : vector<8x16xf32>
    %83 = math.tanh %82 : vector<8x16xf32>
    %84 = arith.mulf %77, %83 : vector<8x16xf32>
    %85 = vector.extract_strided_slice %6 {offsets = [32, 0], sizes = [8, 64], strides = [1, 1]} : vector<64x64xf32> to vector<8x64xf32>
    %cst_17 = arith.constant dense<0.000000e+00> : vector<8x64xf32>
    %86 = tpu.matmul %84, %0, %cst_17 {dimension_numbers = #tpu.dot_dimension_numbers<[1], [0], [0], [1], [0, 0, 1, 1], [], []>} : vector<8x16xf32>, vector<16x64xf32>, vector<8x64xf32> -> vector<8x64xf32>
    %87 = arith.addf %85, %86 : vector<8x64xf32>
    %88 = vector.extract_strided_slice %87 {offsets = [0, 0], sizes = [8, 48], strides = [1, 1]} : vector<8x64xf32> to vector<8x48xf32>
    %89 = arith.negf %88 : vector<8x48xf32>
    %90 = math.exp %89 : vector<8x48xf32>
    %cst_18 = arith.constant 1.000000e+00 : f32
    %91 = vector.broadcast %cst_18 : f32 to vector<8x48xf32>
    %92 = arith.addf %91, %90 : vector<8x48xf32>
    %93 = arith.divf %91, %92 : vector<8x48xf32>
    %94 = vector.extract_strided_slice %93 {offsets = [0, 0], sizes = [8, 16], strides = [1, 1]} : vector<8x48xf32> to vector<8x16xf32>
    %95 = vector.extract_strided_slice %93 {offsets = [0, 16], sizes = [8, 16], strides = [1, 1]} : vector<8x48xf32> to vector<8x16xf32>
    %96 = vector.extract_strided_slice %93 {offsets = [0, 32], sizes = [8, 16], strides = [1, 1]} : vector<8x48xf32> to vector<8x16xf32>
    %97 = vector.extract_strided_slice %87 {offsets = [0, 48], sizes = [8, 16], strides = [1, 1]} : vector<8x64xf32> to vector<8x16xf32>
    %98 = math.tanh %97 : vector<8x16xf32>
    %99 = arith.mulf %95, %82 : vector<8x16xf32>
    %100 = arith.mulf %94, %98 : vector<8x16xf32>
    %101 = arith.addf %99, %100 : vector<8x16xf32>
    %102 = math.tanh %101 : vector<8x16xf32>
    %103 = arith.mulf %96, %102 : vector<8x16xf32>
    %104 = vector.extract_strided_slice %6 {offsets = [40, 0], sizes = [8, 64], strides = [1, 1]} : vector<64x64xf32> to vector<8x64xf32>
    %cst_19 = arith.constant dense<0.000000e+00> : vector<8x64xf32>
    %105 = tpu.matmul %103, %0, %cst_19 {dimension_numbers = #tpu.dot_dimension_numbers<[1], [0], [0], [1], [0, 0, 1, 1], [], []>} : vector<8x16xf32>, vector<16x64xf32>, vector<8x64xf32> -> vector<8x64xf32>
    %106 = arith.addf %104, %105 : vector<8x64xf32>
    %107 = vector.extract_strided_slice %106 {offsets = [0, 0], sizes = [8, 48], strides = [1, 1]} : vector<8x64xf32> to vector<8x48xf32>
    %108 = arith.negf %107 : vector<8x48xf32>
    %109 = math.exp %108 : vector<8x48xf32>
    %cst_20 = arith.constant 1.000000e+00 : f32
    %110 = vector.broadcast %cst_20 : f32 to vector<8x48xf32>
    %111 = arith.addf %110, %109 : vector<8x48xf32>
    %112 = arith.divf %110, %111 : vector<8x48xf32>
    %113 = vector.extract_strided_slice %112 {offsets = [0, 0], sizes = [8, 16], strides = [1, 1]} : vector<8x48xf32> to vector<8x16xf32>
    %114 = vector.extract_strided_slice %112 {offsets = [0, 16], sizes = [8, 16], strides = [1, 1]} : vector<8x48xf32> to vector<8x16xf32>
    %115 = vector.extract_strided_slice %112 {offsets = [0, 32], sizes = [8, 16], strides = [1, 1]} : vector<8x48xf32> to vector<8x16xf32>
    %116 = vector.extract_strided_slice %106 {offsets = [0, 48], sizes = [8, 16], strides = [1, 1]} : vector<8x64xf32> to vector<8x16xf32>
    %117 = math.tanh %116 : vector<8x16xf32>
    %118 = arith.mulf %114, %101 : vector<8x16xf32>
    %119 = arith.mulf %113, %117 : vector<8x16xf32>
    %120 = arith.addf %118, %119 : vector<8x16xf32>
    %121 = math.tanh %120 : vector<8x16xf32>
    %122 = arith.mulf %115, %121 : vector<8x16xf32>
    %123 = vector.extract_strided_slice %6 {offsets = [48, 0], sizes = [8, 64], strides = [1, 1]} : vector<64x64xf32> to vector<8x64xf32>
    %cst_21 = arith.constant dense<0.000000e+00> : vector<8x64xf32>
    %124 = tpu.matmul %122, %0, %cst_21 {dimension_numbers = #tpu.dot_dimension_numbers<[1], [0], [0], [1], [0, 0, 1, 1], [], []>} : vector<8x16xf32>, vector<16x64xf32>, vector<8x64xf32> -> vector<8x64xf32>
    %125 = arith.addf %123, %124 : vector<8x64xf32>
    %126 = vector.extract_strided_slice %125 {offsets = [0, 0], sizes = [8, 48], strides = [1, 1]} : vector<8x64xf32> to vector<8x48xf32>
    %127 = arith.negf %126 : vector<8x48xf32>
    %128 = math.exp %127 : vector<8x48xf32>
    %cst_22 = arith.constant 1.000000e+00 : f32
    %129 = vector.broadcast %cst_22 : f32 to vector<8x48xf32>
    %130 = arith.addf %129, %128 : vector<8x48xf32>
    %131 = arith.divf %129, %130 : vector<8x48xf32>
    %132 = vector.extract_strided_slice %131 {offsets = [0, 0], sizes = [8, 16], strides = [1, 1]} : vector<8x48xf32> to vector<8x16xf32>
    %133 = vector.extract_strided_slice %131 {offsets = [0, 16], sizes = [8, 16], strides = [1, 1]} : vector<8x48xf32> to vector<8x16xf32>
    %134 = vector.extract_strided_slice %131 {offsets = [0, 32], sizes = [8, 16], strides = [1, 1]} : vector<8x48xf32> to vector<8x16xf32>
    %135 = vector.extract_strided_slice %125 {offsets = [0, 48], sizes = [8, 16], strides = [1, 1]} : vector<8x64xf32> to vector<8x16xf32>
    %136 = math.tanh %135 : vector<8x16xf32>
    %137 = arith.mulf %133, %120 : vector<8x16xf32>
    %138 = arith.mulf %132, %136 : vector<8x16xf32>
    %139 = arith.addf %137, %138 : vector<8x16xf32>
    %140 = math.tanh %139 : vector<8x16xf32>
    %141 = arith.mulf %134, %140 : vector<8x16xf32>
    %142 = vector.extract_strided_slice %6 {offsets = [56, 0], sizes = [8, 64], strides = [1, 1]} : vector<64x64xf32> to vector<8x64xf32>
    %cst_23 = arith.constant dense<0.000000e+00> : vector<8x64xf32>
    %143 = tpu.matmul %141, %0, %cst_23 {dimension_numbers = #tpu.dot_dimension_numbers<[1], [0], [0], [1], [0, 0, 1, 1], [], []>} : vector<8x16xf32>, vector<16x64xf32>, vector<8x64xf32> -> vector<8x64xf32>
    %144 = arith.addf %142, %143 : vector<8x64xf32>
    %145 = vector.extract_strided_slice %144 {offsets = [0, 0], sizes = [8, 48], strides = [1, 1]} : vector<8x64xf32> to vector<8x48xf32>
    %146 = arith.negf %145 : vector<8x48xf32>
    %147 = math.exp %146 : vector<8x48xf32>
    %cst_24 = arith.constant 1.000000e+00 : f32
    %148 = vector.broadcast %cst_24 : f32 to vector<8x48xf32>
    %149 = arith.addf %148, %147 : vector<8x48xf32>
    %150 = arith.divf %148, %149 : vector<8x48xf32>
    %151 = vector.extract_strided_slice %150 {offsets = [0, 0], sizes = [8, 16], strides = [1, 1]} : vector<8x48xf32> to vector<8x16xf32>
    %152 = vector.extract_strided_slice %150 {offsets = [0, 16], sizes = [8, 16], strides = [1, 1]} : vector<8x48xf32> to vector<8x16xf32>
    %153 = vector.extract_strided_slice %150 {offsets = [0, 32], sizes = [8, 16], strides = [1, 1]} : vector<8x48xf32> to vector<8x16xf32>
    %154 = vector.extract_strided_slice %144 {offsets = [0, 48], sizes = [8, 16], strides = [1, 1]} : vector<8x64xf32> to vector<8x16xf32>
    %155 = math.tanh %154 : vector<8x16xf32>
    %156 = arith.mulf %152, %139 : vector<8x16xf32>
    %157 = arith.mulf %151, %155 : vector<8x16xf32>
    %158 = arith.addf %156, %157 : vector<8x16xf32>
    %159 = math.tanh %158 : vector<8x16xf32>
    %160 = arith.mulf %153, %159 : vector<8x16xf32>
    %161 = tpu.concatenate %27, %46, %65, %84, %103, %122, %141, %160 in 0 : vector<8x16xf32>, vector<8x16xf32>, vector<8x16xf32>, vector<8x16xf32>, vector<8x16xf32>, vector<8x16xf32>, vector<8x16xf32>, vector<8x16xf32> -> vector<64x16xf32>
    %c0_25 = arith.constant 0 : index
    %c0_26 = arith.constant 0 : index
    %162 = vector.load %arg4[%c0_25, %c0_26] : memref<16x64xf32, #tpu.memory_space<vmem>>, vector<16x64xf32>
    %cst_27 = arith.constant dense<0.000000e+00> : vector<64x64xf32>
    %163 = tpu.matmul %161, %162, %cst_27 {dimension_numbers = #tpu.dot_dimension_numbers<[1], [0], [0], [1], [0, 0, 1, 1], [], []>} : vector<64x16xf32>, vector<16x64xf32>, vector<64x64xf32> -> vector<64x64xf32>
    %c0_28 = arith.constant 0 : index
    %c0_29 = arith.constant 0 : index
    %164 = vector.load %arg5[%c0_28, %c0_29] : memref<1x64xf32, #tpu.memory_space<vmem>>, vector<1x64xf32>
    %165 = vector.broadcast %164 : vector<1x64xf32> to vector<64x64xf32>
    %166 = arith.addf %163, %165 : vector<64x64xf32>
    %cst_30 = arith.constant 0.000000e+00 : f32
    %167 = vector.broadcast %cst_30 : f32 to vector<64x64xf32>
    %168 = arith.maximumf %166, %167 : vector<64x64xf32>
    %c0_31 = arith.constant 0 : index
    %c0_32 = arith.constant 0 : index
    %169 = vector.load %arg6[%c0_31, %c0_32] : memref<64x128xf32, #tpu.memory_space<vmem>>, vector<64x128xf32>
    %cst_33 = arith.constant dense<0.000000e+00> : vector<64x128xf32>
    %170 = tpu.matmul %168, %169, %cst_33 {dimension_numbers = #tpu.dot_dimension_numbers<[1], [0], [0], [1], [0, 0, 1, 1], [], []>} : vector<64x64xf32>, vector<64x128xf32>, vector<64x128xf32> -> vector<64x128xf32>
    %c0_34 = arith.constant 0 : index
    %c0_35 = arith.constant 0 : index
    %171 = vector.load %arg7[%c0_34, %c0_35] : memref<1x128xf32, #tpu.memory_space<vmem>>, vector<1x128xf32>
    %172 = vector.broadcast %171 : vector<1x128xf32> to vector<64x128xf32>
    %173 = arith.addf %170, %172 : vector<64x128xf32>
    %c0_36 = arith.constant 0 : index
    %c0_37 = arith.constant 0 : index
    %174 = vector.load %arg8[%c0_36, %c0_37] : memref<64x128xf32, #tpu.memory_space<vmem>>, vector<64x128xf32>
    tpu.vector_store %arg8[%c0_36, %c0_37], %173 {strides = array<i32>} : memref<64x128xf32, #tpu.memory_space<vmem>>, vector<64x128xf32>,
    return
  }
}

</mosaic_0001>

<llo_original>
// kernel: tpu_custom_call.1
$region0: #{tpu_custom_call.1}
  #allocation0 [shape = 'u32[]', space=smem, size = 0x4, offset = 0x4, fixed_abs, tag = 'smem constant byte address 0x4 - core index']
  #allocation1 [shape = 'u32[144,128]{1,0:T(1,128)}', space=vmem, size = 0x12000, scoped, tag = 'internal scratch']
  %s0 = inlined_call_operand.vmem [shape: f32[64,4], index: 0, kind: input, shape index: {}]
  %s1 = inlined_call_operand.vmem [shape: f32[4,64], index: 1, kind: input, shape index: {}]
  %s2 = inlined_call_operand.vmem [shape: f32[16,64], index: 2, kind: input, shape index: {}]
  %s3 = inlined_call_operand.vmem [shape: f32[1,64], index: 3, kind: input, shape index: {}]
  %s4 = inlined_call_operand.hbm [shape: f32[16,64], index: 4, kind: input, shape index: {}]
  %s5 = inlined_call_operand.vmem [shape: f32[1,64], index: 5, kind: input, shape index: {}]
  %s6 = inlined_call_operand.vmem [shape: f32[64,128], index: 6, kind: input, shape index: {}]
  %s7 = inlined_call_operand.vmem [shape: f32[1,128], index: 7, kind: input, shape index: {}]
  %s8 = inlined_call_operand.hbm [shape: f32[64,128], index: 8, kind: output, shape index: {}]
  %s9 = sld [smem:[#allocation0]]
  $region46: #{tpu_custom_call.1} parent=0
    _
  %s11 = ssub.s32 1, %s9
  %s12 = scalar_select 0, %s11, %s9
  $region1: #{tpu_custom_call.1} parent=0
    #allocation2 [shape = 'u8[8192]{0}', space=vmem, size = 0x2000, scoped, tag = 'input window, operand 4, single buffered']
    #allocation3 [shape = 's32[1]{0}', space=sflag, size = 0x4, scoped, tag = 'scoped memory for tpu_custom_call.1']
    #allocation4 [shape = 's32[1]{0}', space=sflag, size = 0x4, scoped, tag = 'scoped memory for tpu_custom_call.1']
    #allocation5 [shape = 'u8[32768]{0}', space=vmem, size = 0x8000, scoped, tag = 'output window, operand 0, single buffered']
    %13 = vsyncpa [#allocation3], 0
    %14 = vsyncpa [#allocation4], 0
    // Predicated region
    $region2: #{tpu_custom_call.1} parent=1 // pred_check
      _
    $region3: #{tpu_custom_call.1} parent=1 // pred_check_branch
      %16 = sbr.rel (0) target = $region5
    $region4: #{tpu_custom_call.1} parent=1 // pred_region
      _
    $region5: #{tpu_custom_call.1} parent=1 // pred_fallthru
      _
    // Predicated region
    $region6: #{tpu_custom_call.1} parent=1 // pred_check
      _
    $region7: #{tpu_custom_call.1} parent=1 // pred_check_branch
      %18 = sbr.rel (0) target = $region9
    $region8: #{tpu_custom_call.1} parent=1 // pred_region
      _
    $region9: #{tpu_custom_call.1} parent=1 // pred_fallthru
      _
    // Predicated region
    $region10: #{tpu_custom_call.1} parent=1 // pred_check
      _
    $region11: #{tpu_custom_call.1} parent=1 // pred_check_branch
      %20 = sbr.rel (0) target = $region13
    $region12: #{tpu_custom_call.1} parent=1 // pred_region
      _
    $region13: #{tpu_custom_call.1} parent=1 // pred_fallthru
      _
    // Predicated region
    $region14: #{tpu_custom_call.1} parent=1 // pred_check
      _
    $region15: #{tpu_custom_call.1} parent=1 // pred_check_branch
      %22 = sbr.rel (0) target = $region17
    $region16: #{tpu_custom_call.1} parent=1 // pred_region
      _
    $region17: #{tpu_custom_call.1} parent=1 // pred_fallthru
      _
    // Predicated region
    $region18: #{tpu_custom_call.1} parent=1 // pred_check
      _
    $region19: #{tpu_custom_call.1} parent=1 // pred_check_branch
      %24 = sbr.rel (0) target = $region21
    $region20: #{tpu_custom_call.1} parent=1 // pred_region
      %s26 = ssub.s32 256, 256
      %27 = vsyncadd [#allocation3], %s26
      %s28 = sshll.u32 [#allocation2], 4
      %s29 = int_to_ptr.vmem [resolvable:$true] %s28
      %34 = dma.hbm_to_vmem [thread:$0]  %s4, 256, %s29, [#allocation3], 128, 128, 8
    $region21: #{tpu_custom_call.1} parent=1 // pred_fallthru
      _
    // Predicated region
    $region22: #{tpu_custom_call.1} parent=1 // pred_check
      _
    $region23: #{tpu_custom_call.1} parent=1 // pred_check_branch
      %36 = sbr.rel (0) target = $region25
    $region24: #{tpu_custom_call.1} parent=1 // pred_region
      _
    $region25: #{tpu_custom_call.1} parent=1 // pred_fallthru
      _
    // Predicated region
    $region26: #{tpu_custom_call.1} parent=1 // pred_check
      _
    $region27: #{tpu_custom_call.1} parent=1 // pred_check_branch
      %38 = sbr.rel (0) target = $region29
    $region28: #{tpu_custom_call.1} parent=1 // pred_region
      _
    $region29: #{tpu_custom_call.1} parent=1 // pred_fallthru
      _
    // Predicated region
    $region30: #{tpu_custom_call.1} parent=1 // pred_check
      _
    $region31: #{tpu_custom_call.1} parent=1 // pred_check_branch
      %40 = sbr.rel (0) target = $region33
    $region32: #{tpu_custom_call.1} parent=1 // pred_region
      _
    $region33: #{tpu_custom_call.1} parent=1 // pred_fallthru
      _
    // Predicated region
    $region34: #{tpu_custom_call.1} parent=1 // pred_check
      _
    $region35: #{tpu_custom_call.1} parent=1 // pred_check_branch
      %42 = sbr.rel (0) target = $region37
    $region36: #{tpu_custom_call.1} parent=1 // pred_region
      %43 = dma.done [#allocation3], 256
    $region37: #{tpu_custom_call.1} parent=1 // pred_fallthru
      _
    %v44 = vld [vmem:[%s2] sm:$0xff]
    %v45 = vld [vmem:[%s2 + $0x8] sm:$0xff]
    %v46 = vld [vmem:[%s0] sm:$0xff]
    %v47 = vld [vmem:[%s0 + $0x8] sm:$0xff]
    %v48 = vld [vmem:[%s0 + $0x10] sm:$0xff]
    %v49 = vld [vmem:[%s0 + $0x18] sm:$0xff]
    %v50 = vld [vmem:[%s0 + $0x20] sm:$0xff]
    %v51 = vld [vmem:[%s0 + $0x28] sm:$0xff]
    %v52 = vld [vmem:[%s0 + $0x30] sm:$0xff]
    %v53 = vld [vmem:[%s0 + $0x38] sm:$0xff]
    %v54 = vld [vmem:[%s1] sm:$0xf]
    %v55 = vld [vmem:[%s3] sm:$0x1]
    %v57 = vlaneseq
    %v58 = vshrl.u32 %v57, 7
    %v59 = vsub.s32 0, %v58
    %v60 = vrot.slane %v55, %v59
    %vm62 = vcmask 31744
    %v64 = vsel %vm62, %v46, 0
    %v67 = vsel %vm62, %v47, 0
    %v70 = vsel %vm62, %v48, 0
    %v73 = vsel %vm62, %v49, 0
    %v76 = vsel %vm62, %v50, 0
    %v79 = vsel %vm62, %v51, 0
    %v82 = vsel %vm62, %v52, 0
    %v85 = vsel %vm62, %v53, 0
    %vm87 = vcmask 1043456
    %v89 = vsel %vm87, %v54, 0
    %91 = vmatprep.subr.mxu0 0.0
    %92 = vmatpush1.msra.mxu0 %v89
    %93 = vmatprep.subr.mxu0 0.0
    %94 = vmatpush1.msra.mxu0 0.0
    %95 = vmatprep.subr.mxu0 0.0
    %96 = vmatpush1.msra.mxu0 0.0
    %97 = vmatprep.subr.mxu0 0.0
    %98 = vmatpush1.msra.mxu0 0.0
    %99 = vmatprep.subr.mxu0 0.0
    %100 = vmatpush1.msra.mxu0 0.0
    %101 = vmatprep.subr.mxu0 0.0
    %102 = vmatpush1.msra.mxu0 0.0
    %103 = vmatprep.subr.mxu0 0.0
    %104 = vmatpush1.msra.mxu0 0.0
    %105 = vmatprep.subr.mxu0 0.0
    %106 = vmatpush1.msra.mxu0 0.0
    %107 = vmatprep.subr.mxu0 0.0
    %108 = vmatpush1.msra.mxu0 0.0
    %109 = vmatprep.subr.mxu0 0.0
    %110 = vmatpush1.msra.mxu0 0.0
    %111 = vmatprep.subr.mxu0 0.0
    %112 = vmatpush1.msra.mxu0 0.0
    %113 = vmatprep.subr.mxu0 0.0
    %114 = vmatpush1.msra.mxu0 0.0
    %115 = vmatprep.subr.mxu0 0.0
    %116 = vmatpush1.msra.mxu0 0.0
    %117 = vmatprep.subr.mxu0 0.0
    %118 = vmatpush1.msra.mxu0 0.0
    %119 = vmatprep.subr.mxu0 0.0
    %120 = vmatpush1.msra.mxu0 0.0
    %121 = vmatprep.subr.mxu0 0.0
    %122 = vmatpush1.msra.mxu0 0.0
    %123 = vmatprep.subr.mxu0 0.0
    %124 = vmatpush1.msra.mxu0 0.0
    %125 = vmatprep.subr.mxu0 0.0
    %126 = vmatpush1.msra.mxu0 0.0
    %127 = vmatprep.subr.mxu0 0.0
    %128 = vmatpush1.msra.mxu0 0.0
    %129 = vmatprep.subr.mxu0 0.0
    %130 = vmatpush1.msra.mxu0 0.0
    %131 = vmatprep.subr.mxu0 0.0
    %132 = vmatpush1.msra.mxu0 0.0
    %133 = vmatprep.subr.mxu0 0.0
    %134 = vmatpush1.msra.mxu0 0.0
    %135 = vmatprep.subr.mxu0 0.0
    %136 = vmatpush1.msra.mxu0 0.0
    %137 = vmatprep.subr.mxu0 0.0
    %138 = vmatpush1.msra.mxu0 0.0
    %139 = vmatprep.subr.mxu0 0.0
    %140 = vmatpush1.msra.mxu0 0.0
    %141 = vmatprep.subr.mxu0 0.0
    %142 = vmatpush1.msra.mxu0 0.0
    %143 = vmatprep.subr.mxu0 0.0
    %144 = vmatpush1.msra.mxu0 0.0
    %145 = vmatprep.subr.mxu0 0.0
    %146 = vmatpush1.msra.mxu0 0.0
    %147 = vmatprep.subr.mxu0 0.0
    %148 = vmatpush1.msra.mxu0 0.0
    %149 = vmatprep.subr.mxu0 0.0
    %150 = vmatpush1.msra.mxu0 0.0
    %151 = vmatprep.subr.mxu0 0.0
    %152 = vmatpush1.msra.mxu0 0.0
    %153 = vmatprep.subr.mxu0 0.0
    %154 = vmatpush1.msra.mxu0 0.0
    %155 = vmatprep.mubr.f32.mxu0 0.0
    %156 = vmatmul.mubr.f32.gmra.mrb[0].mxu0 %v64
    %v157 = vpop.f32.mrb[0].mxu0
    %v158 = vadd.f32 %v60, %v157
    %v159 = vpop.f32.mrb[0].mxu0
    %160 = vmatprep.mubr.f32.mxu0 0.0
    %161 = vmatmul.mubr.f32.gmra.mrb[0].mxu0 %v67
    %v162 = vpop.f32.mrb[0].mxu0
    %v163 = vadd.f32 %v60, %v162
    %v164 = vpop.f32.mrb[0].mxu0
    %165 = vmatprep.mubr.f32.mxu0 0.0
    %166 = vmatmul.mubr.f32.gmra.mrb[0].mxu0 %v70
    %v167 = vpop.f32.mrb[0].mxu0
    %v168 = vadd.f32 %v60, %v167
    %v169 = vpop.f32.mrb[0].mxu0
    %170 = vmatprep.mubr.f32.mxu0 0.0
    %171 = vmatmul.mubr.f32.gmra.mrb[0].mxu0 %v73
    %v172 = vpop.f32.mrb[0].mxu0
    %v173 = vadd.f32 %v60, %v172
    %v174 = vpop.f32.mrb[0].mxu0
    %175 = vmatprep.mubr.f32.mxu0 0.0
    %176 = vmatmul.mubr.f32.gmra.mrb[0].mxu0 %v76
    %v177 = vpop.f32.mrb[0].mxu0
    %v178 = vadd.f32 %v60, %v177
    %v179 = vpop.f32.mrb[0].mxu0
    %180 = vmatprep.mubr.f32.mxu0 0.0
    %181 = vmatmul.mubr.f32.gmra.mrb[0].mxu0 %v79
    %v182 = vpop.f32.mrb[0].mxu0
    %v183 = vadd.f32 %v60, %v182
    %v184 = vpop.f32.mrb[0].mxu0
    %185 = vmatprep.mubr.f32.mxu0 0.0
    %186 = vmatmul.mubr.f32.gmra.mrb[0].mxu0 %v82
    %v187 = vpop.f32.mrb[0].mxu0
    %v188 = vadd.f32 %v60, %v187
    %v189 = vpop.f32.mrb[0].mxu0
    %190 = vmatprep.mubr.f32.mxu0 0.0
    %191 = vmatmul.mubr.f32.gmra.mrb[0].mxu0 %v85
    %v192 = vpop.f32.mrb[0].mxu0
    %v193 = vadd.f32 %v60, %v192
    %v194 = vpop.f32.mrb[0].mxu0
    %195 = vdwg.mxu0
    %vm196 = vcmask 130048
    %v198 = vsel %vm196, 0.0, 0
    %200 = vmatprep.subr.mxu0 0.0
    %201 = vmatpush1.msra.mxu0 %v44
    %202 = vmatprep.subr.mxu0 0.0
    %203 = vmatpush1.msra.mxu0 %v45
    %204 = vmatprep.subr.mxu0 0.0
    %205 = vmatpush1.msra.mxu0 0.0
    %206 = vmatprep.subr.mxu0 0.0
    %207 = vmatpush1.msra.mxu0 0.0
    %208 = vmatprep.subr.mxu0 0.0
    %209 = vmatpush1.msra.mxu0 0.0
    %210 = vmatprep.subr.mxu0 0.0
    %211 = vmatpush1.msra.mxu0 0.0
    %212 = vmatprep.subr.mxu0 0.0
    %213 = vmatpush1.msra.mxu0 0.0
    %214 = vmatprep.subr.mxu0 0.0
    %215 = vmatpush1.msra.mxu0 0.0
    %216 = vmatprep.subr.mxu0 0.0
    %217 = vmatpush1.msra.mxu0 0.0
    %218 = vmatprep.subr.mxu0 0.0
    %219 = vmatpush1.msra.mxu0 0.0
    %220 = vmatprep.subr.mxu0 0.0
    %221 = vmatpush1.msra.mxu0 0.0
    %222 = vmatprep.subr.mxu0 0.0
    %223 = vmatpush1.msra.mxu0 0.0
    %224 = vmatprep.subr.mxu0 0.0
    %225 = vmatpush1.msra.mxu0 0.0
    %226 = vmatprep.subr.mxu0 0.0
    %227 = vmatpush1.msra.mxu0 0.0
    %228 = vmatprep.subr.mxu0 0.0
    %229 = vmatpush1.msra.mxu0 0.0
    %230 = vmatprep.subr.mxu0 0.0
    %231 = vmatpush1.msra.mxu0 0.0
    %232 = vmatprep.subr.mxu0 0.0
    %233 = vmatpush1.msra.mxu0 0.0
    %234 = vmatprep.subr.mxu0 0.0
    %235 = vmatpush1.msra.mxu0 0.0
    %236 = vmatprep.subr.mxu0 0.0
    %237 = vmatpush1.msra.mxu0 0.0
    %238 = vmatprep.subr.mxu0 0.0
    %239 = vmatpush1.msra.mxu0 0.0
    %240 = vmatprep.subr.mxu0 0.0
    %241 = vmatpush1.msra.mxu0 0.0
    %242 = vmatprep.subr.mxu0 0.0
    %243 = vmatpush1.msra.mxu0 0.0
    %244 = vmatprep.subr.mxu0 0.0
    %245 = vmatpush1.msra.mxu0 0.0
    %246 = vmatprep.subr.mxu0 0.0
    %247 = vmatpush1.msra.mxu0 0.0
    %248 = vmatprep.subr.mxu0 0.0
    %249 = vmatpush1.msra.mxu0 0.0
    %250 = vmatprep.subr.mxu0 0.0
    %251 = vmatpush1.msra.mxu0 0.0
    %252 = vmatprep.subr.mxu0 0.0
    %253 = vmatpush1.msra.mxu0 0.0
    %254 = vmatprep.subr.mxu0 0.0
    %255 = vmatpush1.msra.mxu0 0.0
    %256 = vmatprep.subr.mxu0 0.0
    %257 = vmatpush1.msra.mxu0 0.0
    %258 = vmatprep.subr.mxu0 0.0
    %259 = vmatpush1.msra.mxu0 0.0
    %260 = vmatprep.subr.mxu0 0.0
    %261 = vmatpush1.msra.mxu0 0.0
    %262 = vmatprep.subr.mxu0 0.0
    %263 = vmatpush1.msra.mxu0 0.0
    %264 = vmatprep.mubr.f32.mxu0 0.0
    %265 = vmatmul.mubr.f32.gmra.mrb[0].mxu0 %v198
    %v266 = vpop.f32.mrb[0].mxu0
    %v267 = vadd.f32 0.0, %v266
    %v268 = vpop.f32.mrb[0].mxu0
    %269 = vdwg.mxu0
    %v270 = vadd.f32 %v158, %v267
    %v271 = vxor.u32 %v270, 2147483648
    %v272 = vmul.f32 %v271, 1.442695
    %v273 = vpow.pop %v272
    %v274 = vadd.f32 %v273, 1.0
    %v275 = vrcp.pop %v274
    %v276 = vmul.f32 1.0, %v275
    %v277 = vtanh.pop %v270
    %v278 = vmul.f32 %v276, 0.0
    %280 = vrot.lane.b32.xlu0 %v277, 80
    %v281 = vpop.permute.xlu0 %280
    %v283 = vmul.f32 %v276, %v281
    %285 = vrot.lane.b32.xlu0 %v283, 16
    %v286 = vpop.permute.xlu0 %285
    %v288 = vadd.f32 %v278, %v286
    %v289 = vtanh.pop %v288
    %291 = vrot.lane.b32.xlu0 %v289, 16
    %v292 = vpop.permute.xlu0 %291
    %v294 = vmul.f32 %v276, %v292
    %296 = vrot.lane.b32.xlu0 %v294, 96
    %v297 = vpop.permute.xlu0 %296
    %v298 = vsel %vm196, %v297, 0
    %300 = vmatprep.subr.mxu0 0.0
    %301 = vmatpush1.msra.mxu0 %v44
    %302 = vmatprep.subr.mxu0 0.0
    %303 = vmatpush1.msra.mxu0 %v45
    %304 = vmatprep.subr.mxu0 0.0
    %305 = vmatpush1.msra.mxu0 0.0
    %306 = vmatprep.subr.mxu0 0.0
    %307 = vmatpush1.msra.mxu0 0.0
    %308 = vmatprep.subr.mxu0 0.0
    %309 = vmatpush1.msra.mxu0 0.0
    %310 = vmatprep.subr.mxu0 0.0
    %311 = vmatpush1.msra.mxu0 0.0
    %312 = vmatprep.subr.mxu0 0.0
    %313 = vmatpush1.msra.mxu0 0.0
    %314 = vmatprep.subr.mxu0 0.0
    %315 = vmatpush1.msra.mxu0 0.0
    %316 = vmatprep.subr.mxu0 0.0
    %317 = vmatpush1.msra.mxu0 0.0
    %318 = vmatprep.subr.mxu0 0.0
    %319 = vmatpush1.msra.mxu0 0.0
    %320 = vmatprep.subr.mxu0 0.0
    %321 = vmatpush1.msra.mxu0 0.0
    %322 = vmatprep.subr.mxu0 0.0
    %323 = vmatpush1.msra.mxu0 0.0
    %324 = vmatprep.subr.mxu0 0.0
    %325 = vmatpush1.msra.mxu0 0.0
    %326 = vmatprep.subr.mxu0 0.0
    %327 = vmatpush1.msra.mxu0 0.0
    %328 = vmatprep.subr.mxu0 0.0
    %329 = vmatpush1.msra.mxu0 0.0
    %330 = vmatprep.subr.mxu0 0.0
    %331 = vmatpush1.msra.mxu0 0.0
    %332 = vmatprep.subr.mxu0 0.0
    %333 = vmatpush1.msra.mxu0 0.0
    %334 = vmatprep.subr.mxu0 0.0
    %335 = vmatpush1.msra.mxu0 0.0
    %336 = vmatprep.subr.mxu0 0.0
    %337 = vmatpush1.msra.mxu0 0.0
    %338 = vmatprep.subr.mxu0 0.0
    %339 = vmatpush1.msra.mxu0 0.0
    %340 = vmatprep.subr.mxu0 0.0
    %341 = vmatpush1.msra.mxu0 0.0
    %342 = vmatprep.subr.mxu0 0.0
    %343 = vmatpush1.msra.mxu0 0.0
    %344 = vmatprep.subr.mxu0 0.0
    %345 = vmatpush1.msra.mxu0 0.0
    %346 = vmatprep.subr.mxu0 0.0
    %347 = vmatpush1.msra.mxu0 0.0
    %348 = vmatprep.subr.mxu0 0.0
    %349 = vmatpush1.msra.mxu0 0.0
    %350 = vmatprep.subr.mxu0 0.0
    %351 = vmatpush1.msra.mxu0 0.0
    %352 = vmatprep.subr.mxu0 0.0
    %353 = vmatpush1.msra.mxu0 0.0
    %354 = vmatprep.subr.mxu0 0.0
    %355 = vmatpush1.msra.mxu0 0.0
    %356 = vmatprep.subr.mxu0 0.0
    %357 = vmatpush1.msra.mxu0 0.0
    %358 = vmatprep.subr.mxu0 0.0
    %359 = vmatpush1.msra.mxu0 0.0
    %360 = vmatprep.subr.mxu0 0.0
    %361 = vmatpush1.msra.mxu0 0.0
    %362 = vmatprep.subr.mxu0 0.0
    %363 = vmatpush1.msra.mxu0 0.0
    %364 = vmatprep.mubr.f32.mxu0 0.0
    %365 = vmatmul.mubr.f32.gmra.mrb[0].mxu0 %v298
    %v366 = vpop.f32.mrb[0].mxu0
    %v367 = vadd.f32 0.0, %v366
    %v368 = vpop.f32.mrb[0].mxu0
    %369 = vdwg.mxu0
    %v370 = vadd.f32 %v163, %v367
    %v371 = vxor.u32 %v370, 2147483648
    %v372 = vmul.f32 %v371, 1.442695
    %v373 = vpow.pop %v372
    %v374 = vadd.f32 %v373, 1.0
    %v375 = vrcp.pop %v374
    %v376 = vmul.f32 1.0, %v375
    %v377 = vtanh.pop %v370
    %v378 = vmul.f32 %v376, %v288
    %380 = vrot.lane.b32.xlu0 %v377, 80
    %v381 = vpop.permute.xlu0 %380
    %v383 = vmul.f32 %v376, %v381
    %385 = vrot.lane.b32.xlu0 %v383, 16
    %v386 = vpop.permute.xlu0 %385
    %v388 = vadd.f32 %v378, %v386
    %v389 = vtanh.pop %v388
    %391 = vrot.lane.b32.xlu0 %v389, 16
    %v392 = vpop.permute.xlu0 %391
    %v394 = vmul.f32 %v376, %v392
    %396 = vrot.lane.b32.xlu0 %v394, 96
    %v397 = vpop.permute.xlu0 %396
    %v398 = vsel %vm196, %v397, 0
    %400 = vmatprep.subr.mxu0 0.0
    %401 = vmatpush1.msra.mxu0 %v44
    %402 = vmatprep.subr.mxu0 0.0
    %403 = vmatpush1.msra.mxu0 %v45
    %404 = vmatprep.subr.mxu0 0.0
    %405 = vmatpush1.msra.mxu0 0.0
    %406 = vmatprep.subr.mxu0 0.0
    %407 = vmatpush1.msra.mxu0 0.0
    %408 = vmatprep.subr.mxu0 0.0
    %409 = vmatpush1.msra.mxu0 0.0
    %410 = vmatprep.subr.mxu0 0.0
    %411 = vmatpush1.msra.mxu0 0.0
    %412 = vmatprep.subr.mxu0 0.0
    %413 = vmatpush1.msra.mxu0 0.0
    %414 = vmatprep.subr.mxu0 0.0
    %415 = vmatpush1.msra.mxu0 0.0
    %416 = vmatprep.subr.mxu0 0.0
    %417 = vmatpush1.msra.mxu0 0.0
    %418 = vmatprep.subr.mxu0 0.0
    %419 = vmatpush1.msra.mxu0 0.0
    %420 = vmatprep.subr.mxu0 0.0
    %421 = vmatpush1.msra.mxu0 0.0
    %422 = vmatprep.subr.mxu0 0.0
    %423 = vmatpush1.msra.mxu0 0.0
    %424 = vmatprep.subr.mxu0 0.0
    %425 = vmatpush1.msra.mxu0 0.0
    %426 = vmatprep.subr.mxu0 0.0
    %427 = vmatpush1.msra.mxu0 0.0
    %428 = vmatprep.subr.mxu0 0.0
    %429 = vmatpush1.msra.mxu0 0.0
    %430 = vmatprep.subr.mxu0 0.0
    %431 = vmatpush1.msra.mxu0 0.0
    %432 = vmatprep.subr.mxu0 0.0
    %433 = vmatpush1.msra.mxu0 0.0
    %434 = vmatprep.subr.mxu0 0.0
    %435 = vmatpush1.msra.mxu0 0.0
    %436 = vmatprep.subr.mxu0 0.0
    %437 = vmatpush1.msra.mxu0 0.0
    %438 = vmatprep.subr.mxu0 0.0
    %439 = vmatpush1.msra.mxu0 0.0
    %440 = vmatprep.subr.mxu0 0.0
    %441 = vmatpush1.msra.mxu0 0.0
    %442 = vmatprep.subr.mxu0 0.0
    %443 = vmatpush1.msra.mxu0 0.0
    %444 = vmatprep.subr.mxu0 0.0
    %445 = vmatpush1.msra.mxu0 0.0
    %446 = vmatprep.subr.mxu0 0.0
    %447 = vmatpush1.msra.mxu0 0.0
    %448 = vmatprep.subr.mxu0 0.0
    %449 = vmatpush1.msra.mxu0 0.0
    %450 = vmatprep.subr.mxu0 0.0
    %451 = vmatpush1.msra.mxu0 0.0
    %452 = vmatprep.subr.mxu0 0.0
    %453 = vmatpush1.msra.mxu0 0.0
    %454 = vmatprep.subr.mxu0 0.0
    %455 = vmatpush1.msra.mxu0 0.0
    %456 = vmatprep.subr.mxu0 0.0
    %457 = vmatpush1.msra.mxu0 0.0
    %458 = vmatprep.subr.mxu0 0.0
    %459 = vmatpush1.msra.mxu0 0.0
    %460 = vmatprep.subr.mxu0 0.0
    %461 = vmatpush1.msra.mxu0 0.0
    %462 = vmatprep.subr.mxu0 0.0
    %463 = vmatpush1.msra.mxu0 0.0
    %464 = vmatprep.mubr.f32.mxu0 0.0
    %465 = vmatmul.mubr.f32.gmra.mrb[0].mxu0 %v398
    %v466 = vpop.f32.mrb[0].mxu0
    %v467 = vadd.f32 0.0, %v466
    %v468 = vpop.f32.mrb[0].mxu0
    %469 = vdwg.mxu0
    %v470 = vadd.f32 %v168, %v467
    %v471 = vxor.u32 %v470, 2147483648
    %v472 = vmul.f32 %v471, 1.442695
    %v473 = vpow.pop %v472
    %v474 = vadd.f32 %v473, 1.0
    %v475 = vrcp.pop %v474
    %v476 = vmul.f32 1.0, %v475
    %v477 = vtanh.pop %v470
    %v478 = vmul.f32 %v476, %v388
    %480 = vrot.lane.b32.xlu0 %v477, 80
    %v481 = vpop.permute.xlu0 %480
    %v483 = vmul.f32 %v476, %v481
    %485 = vrot.lane.b32.xlu0 %v483, 16
    %v486 = vpop.permute.xlu0 %485
    %v488 = vadd.f32 %v478, %v486
    %v489 = vtanh.pop %v488
    %491 = vrot.lane.b32.xlu0 %v489, 16
    %v492 = vpop.permute.xlu0 %491
    %v494 = vmul.f32 %v476, %v492
    %496 = vrot.lane.b32.xlu0 %v494, 96
    %v497 = vpop.permute.xlu0 %496
    %v498 = vsel %vm196, %v497, 0
    %500 = vmatprep.subr.mxu0 0.0
    %501 = vmatpush1.msra.mxu0 %v44
    %502 = vmatprep.subr.mxu0 0.0
    %503 = vmatpush1.msra.mxu0 %v45
    %504 = vmatprep.subr.mxu0 0.0
    %505 = vmatpush1.msra.mxu0 0.0
    %506 = vmatprep.subr.mxu0 0.0
    %507 = vmatpush1.msra.mxu0 0.0
    %508 = vmatprep.subr.mxu0 0.0
    %509 = vmatpush1.msra.mxu0 0.0
    %510 = vmatprep.subr.mxu0 0.0
    %511 = vmatpush1.msra.mxu0 0.0
    %512 = vmatprep.subr.mxu0 0.0
    %513 = vmatpush1.msra.mxu0 0.0
    %514 = vmatprep.subr.mxu0 0.0
    %515 = vmatpush1.msra.mxu0 0.0
    %516 = vmatprep.subr.mxu0 0.0
    %517 = vmatpush1.msra.mxu0 0.0
    %518 = vmatprep.subr.mxu0 0.0
    %519 = vmatpush1.msra.mxu0 0.0
    %520 = vmatprep.subr.mxu0 0.0
    %521 = vmatpush1.msra.mxu0 0.0
    %522 = vmatprep.subr.mxu0 0.0
    %523 = vmatpush1.msra.mxu0 0.0
    %524 = vmatprep.subr.mxu0 0.0
    %525 = vmatpush1.msra.mxu0 0.0
    %526 = vmatprep.subr.mxu0 0.0
    %527 = vmatpush1.msra.mxu0 0.0
    %528 = vmatprep.subr.mxu0 0.0
    %529 = vmatpush1.msra.mxu0 0.0
    %530 = vmatprep.subr.mxu0 0.0
    %531 = vmatpush1.msra.mxu0 0.0
    %532 = vmatprep.subr.mxu0 0.0
    %533 = vmatpush1.msra.mxu0 0.0
    %534 = vmatprep.subr.mxu0 0.0
    %535 = vmatpush1.msra.mxu0 0.0
    %536 = vmatprep.subr.mxu0 0.0
    %537 = vmatpush1.msra.mxu0 0.0
    %538 = vmatprep.subr.mxu0 0.0
    %539 = vmatpush1.msra.mxu0 0.0
    %540 = vmatprep.subr.mxu0 0.0
    %541 = vmatpush1.msra.mxu0 0.0
    %542 = vmatprep.subr.mxu0 0.0
    %543 = vmatpush1.msra.mxu0 0.0
    %544 = vmatprep.subr.mxu0 0.0
    %545 = vmatpush1.msra.mxu0 0.0
    %546 = vmatprep.subr.mxu0 0.0
    %547 = vmatpush1.msra.mxu0 0.0
    %548 = vmatprep.subr.mxu0 0.0
    %549 = vmatpush1.msra.mxu0 0.0
    %550 = vmatprep.subr.mxu0 0.0
    %551 = vmatpush1.msra.mxu0 0.0
    %552 = vmatprep.subr.mxu0 0.0
    %553 = vmatpush1.msra.mxu0 0.0
    %554 = vmatprep.subr.mxu0 0.0
    %555 = vmatpush1.msra.mxu0 0.0
    %556 = vmatprep.subr.mxu0 0.0
    %557 = vmatpush1.msra.mxu0 0.0
    %558 = vmatprep.subr.mxu0 0.0
    %559 = vmatpush1.msra.mxu0 0.0
    %560 = vmatprep.subr.mxu0 0.0
    %561 = vmatpush1.msra.mxu0 0.0
    %562 = vmatprep.subr.mxu0 0.0
    %563 = vmatpush1.msra.mxu0 0.0
    %564 = vmatprep.mubr.f32.mxu0 0.0
    %565 = vmatmul.mubr.f32.gmra.mrb[0].mxu0 %v498
    %v566 = vpop.f32.mrb[0].mxu0
    %v567 = vadd.f32 0.0, %v566
    %v568 = vpop.f32.mrb[0].mxu0
    %569 = vdwg.mxu0
    %v570 = vadd.f32 %v173, %v567
    %v571 = vxor.u32 %v570, 2147483648
    %v572 = vmul.f32 %v571, 1.442695
    %v573 = vpow.pop %v572
    %v574 = vadd.f32 %v573, 1.0
    %v575 = vrcp.pop %v574
    %v576 = vmul.f32 1.0, %v575
    %v577 = vtanh.pop %v570
    %v578 = vmul.f32 %v576, %v488
    %580 = vrot.lane.b32.xlu0 %v577, 80
    %v581 = vpop.permute.xlu0 %580
    %v583 = vmul.f32 %v576, %v581
    %585 = vrot.lane.b32.xlu0 %v583, 16
    %v586 = vpop.permute.xlu0 %585
    %v588 = vadd.f32 %v578, %v586
    %v589 = vtanh.pop %v588
    %591 = vrot.lane.b32.xlu0 %v589, 16
    %v592 = vpop.permute.xlu0 %591
    %v594 = vmul.f32 %v576, %v592
    %596 = vrot.lane.b32.xlu0 %v594, 96
    %v597 = vpop.permute.xlu0 %596
    %v598 = vsel %vm196, %v597, 0
    %600 = vmatprep.subr.mxu0 0.0
    %601 = vmatpush1.msra.mxu0 %v44
    %602 = vmatprep.subr.mxu0 0.0
    %603 = vmatpush1.msra.mxu0 %v45
    %604 = vmatprep.subr.mxu0 0.0
    %605 = vmatpush1.msra.mxu0 0.0
    %606 = vmatprep.subr.mxu0 0.0
    %607 = vmatpush1.msra.mxu0 0.0
    %608 = vmatprep.subr.mxu0 0.0
    %609 = vmatpush1.msra.mxu0 0.0
    %610 = vmatprep.subr.mxu0 0.0
    %611 = vmatpush1.msra.mxu0 0.0
    %612 = vmatprep.subr.mxu0 0.0
    %613 = vmatpush1.msra.mxu0 0.0
    %614 = vmatprep.subr.mxu0 0.0
    %615 = vmatpush1.msra.mxu0 0.0
    %616 = vmatprep.subr.mxu0 0.0
    %617 = vmatpush1.msra.mxu0 0.0
    %618 = vmatprep.subr.mxu0 0.0
    %619 = vmatpush1.msra.mxu0 0.0
    %620 = vmatprep.subr.mxu0 0.0
    %621 = vmatpush1.msra.mxu0 0.0
    %622 = vmatprep.subr.mxu0 0.0
    %623 = vmatpush1.msra.mxu0 0.0
    %624 = vmatprep.subr.mxu0 0.0
    %625 = vmatpush1.msra.mxu0 0.0
    %626 = vmatprep.subr.mxu0 0.0
    %627 = vmatpush1.msra.mxu0 0.0
    %628 = vmatprep.subr.mxu0 0.0
    %629 = vmatpush1.msra.mxu0 0.0
    %630 = vmatprep.subr.mxu0 0.0
    %631 = vmatpush1.msra.mxu0 0.0
    %632 = vmatprep.subr.mxu0 0.0
    %633 = vmatpush1.msra.mxu0 0.0
    %634 = vmatprep.subr.mxu0 0.0
    %635 = vmatpush1.msra.mxu0 0.0
    %636 = vmatprep.subr.mxu0 0.0
    %637 = vmatpush1.msra.mxu0 0.0
    %638 = vmatprep.subr.mxu0 0.0
    %639 = vmatpush1.msra.mxu0 0.0
    %640 = vmatprep.subr.mxu0 0.0
    %641 = vmatpush1.msra.mxu0 0.0
    %642 = vmatprep.subr.mxu0 0.0
    %643 = vmatpush1.msra.mxu0 0.0
    %644 = vmatprep.subr.mxu0 0.0
    %645 = vmatpush1.msra.mxu0 0.0
    %646 = vmatprep.subr.mxu0 0.0
    %647 = vmatpush1.msra.mxu0 0.0
    %648 = vmatprep.subr.mxu0 0.0
    %649 = vmatpush1.msra.mxu0 0.0
    %650 = vmatprep.subr.mxu0 0.0
    %651 = vmatpush1.msra.mxu0 0.0
    %652 = vmatprep.subr.mxu0 0.0
    %653 = vmatpush1.msra.mxu0 0.0
    %654 = vmatprep.subr.mxu0 0.0
    %655 = vmatpush1.msra.mxu0 0.0
    %656 = vmatprep.subr.mxu0 0.0
    %657 = vmatpush1.msra.mxu0 0.0
    %658 = vmatprep.subr.mxu0 0.0
    %659 = vmatpush1.msra.mxu0 0.0
    %660 = vmatprep.subr.mxu0 0.0
    %661 = vmatpush1.msra.mxu0 0.0
    %662 = vmatprep.subr.mxu0 0.0
    %663 = vmatpush1.msra.mxu0 0.0
    %664 = vmatprep.mubr.f32.mxu0 0.0
    %665 = vmatmul.mubr.f32.gmra.mrb[0].mxu0 %v598
    %v666 = vpop.f32.mrb[0].mxu0
    %v667 = vadd.f32 0.0, %v666
    %v668 = vpop.f32.mrb[0].mxu0
    %669 = vdwg.mxu0
    %v670 = vadd.f32 %v178, %v667
    %v671 = vxor.u32 %v670, 2147483648
    %v672 = vmul.f32 %v671, 1.442695
    %v673 = vpow.pop %v672
    %v674 = vadd.f32 %v673, 1.0
    %v675 = vrcp.pop %v674
    %v676 = vmul.f32 1.0, %v675
    %v677 = vtanh.pop %v670
    %v678 = vmul.f32 %v676, %v588
    %680 = vrot.lane.b32.xlu0 %v677, 80
    %v681 = vpop.permute.xlu0 %680
    %v683 = vmul.f32 %v676, %v681
    %685 = vrot.lane.b32.xlu0 %v683, 16
    %v686 = vpop.permute.xlu0 %685
    %v688 = vadd.f32 %v678, %v686
    %v689 = vtanh.pop %v688
    %691 = vrot.lane.b32.xlu0 %v689, 16
    %v692 = vpop.permute.xlu0 %691
    %v694 = vmul.f32 %v676, %v692
    %696 = vrot.lane.b32.xlu0 %v694, 96
    %v697 = vpop.permute.xlu0 %696
    %v698 = vsel %vm196, %v697, 0
    %700 = vmatprep.subr.mxu0 0.0
    %701 = vmatpush1.msra.mxu0 %v44
    %702 = vmatprep.subr.mxu0 0.0
    %703 = vmatpush1.msra.mxu0 %v45
    %704 = vmatprep.subr.mxu0 0.0
    %705 = vmatpush1.msra.mxu0 0.0
    %706 = vmatprep.subr.mxu0 0.0
    %707 = vmatpush1.msra.mxu0 0.0
    %708 = vmatprep.subr.mxu0 0.0
    %709 = vmatpush1.msra.mxu0 0.0
    %710 = vmatprep.subr.mxu0 0.0
    %711 = vmatpush1.msra.mxu0 0.0
    %712 = vmatprep.subr.mxu0 0.0
    %713 = vmatpush1.msra.mxu0 0.0
    %714 = vmatprep.subr.mxu0 0.0
    %715 = vmatpush1.msra.mxu0 0.0
    %716 = vmatprep.subr.mxu0 0.0
    %717 = vmatpush1.msra.mxu0 0.0
    %718 = vmatprep.subr.mxu0 0.0
    %719 = vmatpush1.msra.mxu0 0.0
    %720 = vmatprep.subr.mxu0 0.0
    %721 = vmatpush1.msra.mxu0 0.0
    %722 = vmatprep.subr.mxu0 0.0
    %723 = vmatpush1.msra.mxu0 0.0
    %724 = vmatprep.subr.mxu0 0.0
    %725 = vmatpush1.msra.mxu0 0.0
    %726 = vmatprep.subr.mxu0 0.0
    %727 = vmatpush1.msra.mxu0 0.0
    %728 = vmatprep.subr.mxu0 0.0
    %729 = vmatpush1.msra.mxu0 0.0
    %730 = vmatprep.subr.mxu0 0.0
    %731 = vmatpush1.msra.mxu0 0.0
    %732 = vmatprep.subr.mxu0 0.0
    %733 = vmatpush1.msra.mxu0 0.0
    %734 = vmatprep.subr.mxu0 0.0
    %735 = vmatpush1.msra.mxu0 0.0
    %736 = vmatprep.subr.mxu0 0.0
    %737 = vmatpush1.msra.mxu0 0.0
    %738 = vmatprep.subr.mxu0 0.0
    %739 = vmatpush1.msra.mxu0 0.0
    %740 = vmatprep.subr.mxu0 0.0
    %741 = vmatpush1.msra.mxu0 0.0
    %742 = vmatprep.subr.mxu0 0.0
    %743 = vmatpush1.msra.mxu0 0.0
    %744 = vmatprep.subr.mxu0 0.0
    %745 = vmatpush1.msra.mxu0 0.0
    %746 = vmatprep.subr.mxu0 0.0
    %747 = vmatpush1.msra.mxu0 0.0
    %748 = vmatprep.subr.mxu0 0.0
    %749 = vmatpush1.msra.mxu0 0.0
    %750 = vmatprep.subr.mxu0 0.0
    %751 = vmatpush1.msra.mxu0 0.0
    %752 = vmatprep.subr.mxu0 0.0
    %753 = vmatpush1.msra.mxu0 0.0
    %754 = vmatprep.subr.mxu0 0.0
    %755 = vmatpush1.msra.mxu0 0.0
    %756 = vmatprep.subr.mxu0 0.0
    %757 = vmatpush1.msra.mxu0 0.0
    %758 = vmatprep.subr.mxu0 0.0
    %759 = vmatpush1.msra.mxu0 0.0
    %760 = vmatprep.subr.mxu0 0.0
    %761 = vmatpush1.msra.mxu0 0.0
    %762 = vmatprep.subr.mxu0 0.0
    %763 = vmatpush1.msra.mxu0 0.0
    %764 = vmatprep.mubr.f32.mxu0 0.0
    %765 = vmatmul.mubr.f32.gmra.mrb[0].mxu0 %v698
    %v766 = vpop.f32.mrb[0].mxu0
    %v767 = vadd.f32 0.0, %v766
    %v768 = vpop.f32.mrb[0].mxu0
    %769 = vdwg.mxu0
    %v770 = vadd.f32 %v183, %v767
    %v771 = vxor.u32 %v770, 2147483648
    %v772 = vmul.f32 %v771, 1.442695
    %v773 = vpow.pop %v772
    %v774 = vadd.f32 %v773, 1.0
    %v775 = vrcp.pop %v774
    %v776 = vmul.f32 1.0, %v775
    %v777 = vtanh.pop %v770
    %v778 = vmul.f32 %v776, %v688
    %780 = vrot.lane.b32.xlu0 %v777, 80
    %v781 = vpop.permute.xlu0 %780
    %v783 = vmul.f32 %v776, %v781
    %785 = vrot.lane.b32.xlu0 %v783, 16
    %v786 = vpop.permute.xlu0 %785
    %v788 = vadd.f32 %v778, %v786
    %v789 = vtanh.pop %v788
    %791 = vrot.lane.b32.xlu0 %v789, 16
    %v792 = vpop.permute.xlu0 %791
    %v794 = vmul.f32 %v776, %v792
    %796 = vrot.lane.b32.xlu0 %v794, 96
    %v797 = vpop.permute.xlu0 %796
    %v798 = vsel %vm196, %v797, 0
    %800 = vmatprep.subr.mxu0 0.0
    %801 = vmatpush1.msra.mxu0 %v44
    %802 = vmatprep.subr.mxu0 0.0
    %803 = vmatpush1.msra.mxu0 %v45
    %804 = vmatprep.subr.mxu0 0.0
    %805 = vmatpush1.msra.mxu0 0.0
    %806 = vmatprep.subr.mxu0 0.0
    %807 = vmatpush1.msra.mxu0 0.0
    %808 = vmatprep.subr.mxu0 0.0
    %809 = vmatpush1.msra.mxu0 0.0
    %810 = vmatprep.subr.mxu0 0.0
    %811 = vmatpush1.msra.mxu0 0.0
    %812 = vmatprep.subr.mxu0 0.0
    %813 = vmatpush1.msra.mxu0 0.0
    %814 = vmatprep.subr.mxu0 0.0
    %815 = vmatpush1.msra.mxu0 0.0
    %816 = vmatprep.subr.mxu0 0.0
    %817 = vmatpush1.msra.mxu0 0.0
    %818 = vmatprep.subr.mxu0 0.0
    %819 = vmatpush1.msra.mxu0 0.0
    %820 = vmatprep.subr.mxu0 0.0
    %821 = vmatpush1.msra.mxu0 0.0
    %822 = vmatprep.subr.mxu0 0.0
    %823 = vmatpush1.msra.mxu0 0.0
    %824 = vmatprep.subr.mxu0 0.0
    %825 = vmatpush1.msra.mxu0 0.0
    %826 = vmatprep.subr.mxu0 0.0
    %827 = vmatpush1.msra.mxu0 0.0
    %828 = vmatprep.subr.mxu0 0.0
    %829 = vmatpush1.msra.mxu0 0.0
    %830 = vmatprep.subr.mxu0 0.0
    %831 = vmatpush1.msra.mxu0 0.0
    %832 = vmatprep.subr.mxu0 0.0
    %833 = vmatpush1.msra.mxu0 0.0
    %834 = vmatprep.subr.mxu0 0.0
    %835 = vmatpush1.msra.mxu0 0.0
    %836 = vmatprep.subr.mxu0 0.0
    %837 = vmatpush1.msra.mxu0 0.0
    %838 = vmatprep.subr.mxu0 0.0
    %839 = vmatpush1.msra.mxu0 0.0
    %840 = vmatprep.subr.mxu0 0.0
    %841 = vmatpush1.msra.mxu0 0.0
    %842 = vmatprep.subr.mxu0 0.0
    %843 = vmatpush1.msra.mxu0 0.0
    %844 = vmatprep.subr.mxu0 0.0
    %845 = vmatpush1.msra.mxu0 0.0
    %846 = vmatprep.subr.mxu0 0.0
    %847 = vmatpush1.msra.mxu0 0.0
    %848 = vmatprep.subr.mxu0 0.0
    %849 = vmatpush1.msra.mxu0 0.0
    %850 = vmatprep.subr.mxu0 0.0
    %851 = vmatpush1.msra.mxu0 0.0
    %852 = vmatprep.subr.mxu0 0.0
    %853 = vmatpush1.msra.mxu0 0.0
    %854 = vmatprep.subr.mxu0 0.0
    %855 = vmatpush1.msra.mxu0 0.0
    %856 = vmatprep.subr.mxu0 0.0
    %857 = vmatpush1.msra.mxu0 0.0
    %858 = vmatprep.subr.mxu0 0.0
    %859 = vmatpush1.msra.mxu0 0.0
    %860 = vmatprep.subr.mxu0 0.0
    %861 = vmatpush1.msra.mxu0 0.0
    %862 = vmatprep.subr.mxu0 0.0
    %863 = vmatpush1.msra.mxu0 0.0
    %864 = vmatprep.mubr.f32.mxu0 0.0
    %865 = vmatmul.mubr.f32.gmra.mrb[0].mxu0 %v798
    %v866 = vpop.f32.mrb[0].mxu0
    %v867 = vadd.f32 0.0, %v866
    %v868 = vpop.f32.mrb[0].mxu0
    %869 = vdwg.mxu0
    %v870 = vadd.f32 %v188, %v867
    %v871 = vxor.u32 %v870, 2147483648
    %v872 = vmul.f32 %v871, 1.442695
    %v873 = vpow.pop %v872
    %v874 = vadd.f32 %v873, 1.0
    %v875 = vrcp.pop %v874
    %v876 = vmul.f32 1.0, %v875
    %v877 = vtanh.pop %v870
    %v878 = vmul.f32 %v876, %v788
    %880 = vrot.lane.b32.xlu0 %v877, 80
    %v881 = vpop.permute.xlu0 %880
    %v883 = vmul.f32 %v876, %v881
    %885 = vrot.lane.b32.xlu0 %v883, 16
    %v886 = vpop.permute.xlu0 %885
    %v888 = vadd.f32 %v878, %v886
    %v889 = vtanh.pop %v888
    %891 = vrot.lane.b32.xlu0 %v889, 16
    %v892 = vpop.permute.xlu0 %891
    %v894 = vmul.f32 %v876, %v892
    %896 = vrot.lane.b32.xlu0 %v894, 96
    %v897 = vpop.permute.xlu0 %896
    %v898 = vsel %vm196, %v897, 0
    %900 = vmatprep.subr.mxu0 0.0
    %901 = vmatpush1.msra.mxu0 %v44
    %902 = vmatprep.subr.mxu0 0.0
    %903 = vmatpush1.msra.mxu0 %v45
    %904 = vmatprep.subr.mxu0 0.0
    %905 = vmatpush1.msra.mxu0 0.0
    %906 = vmatprep.subr.mxu0 0.0
    %907 = vmatpush1.msra.mxu0 0.0
    %908 = vmatprep.subr.mxu0 0.0
    %909 = vmatpush1.msra.mxu0 0.0
    %910 = vmatprep.subr.mxu0 0.0
    %911 = vmatpush1.msra.mxu0 0.0
    %912 = vmatprep.subr.mxu0 0.0
    %913 = vmatpush1.msra.mxu0 0.0
    %914 = vmatprep.subr.mxu0 0.0
    %915 = vmatpush1.msra.mxu0 0.0
    %916 = vmatprep.subr.mxu0 0.0
    %917 = vmatpush1.msra.mxu0 0.0
    %918 = vmatprep.subr.mxu0 0.0
    %919 = vmatpush1.msra.mxu0 0.0
    %920 = vmatprep.subr.mxu0 0.0
    %921 = vmatpush1.msra.mxu0 0.0
    %922 = vmatprep.subr.mxu0 0.0
    %923 = vmatpush1.msra.mxu0 0.0
    %924 = vmatprep.subr.mxu0 0.0
    %925 = vmatpush1.msra.mxu0 0.0
    %926 = vmatprep.subr.mxu0 0.0
    %927 = vmatpush1.msra.mxu0 0.0
    %928 = vmatprep.subr.mxu0 0.0
    %929 = vmatpush1.msra.mxu0 0.0
    %930 = vmatprep.subr.mxu0 0.0
    %931 = vmatpush1.msra.mxu0 0.0
    %932 = vmatprep.subr.mxu0 0.0
    %933 = vmatpush1.msra.mxu0 0.0
    %934 = vmatprep.subr.mxu0 0.0
    %935 = vmatpush1.msra.mxu0 0.0
    %936 = vmatprep.subr.mxu0 0.0
    %937 = vmatpush1.msra.mxu0 0.0
    %938 = vmatprep.subr.mxu0 0.0
    %939 = vmatpush1.msra.mxu0 0.0
    %940 = vmatprep.subr.mxu0 0.0
    %941 = vmatpush1.msra.mxu0 0.0
    %942 = vmatprep.subr.mxu0 0.0
    %943 = vmatpush1.msra.mxu0 0.0
    %944 = vmatprep.subr.mxu0 0.0
    %945 = vmatpush1.msra.mxu0 0.0
    %946 = vmatprep.subr.mxu0 0.0
    %947 = vmatpush1.msra.mxu0 0.0
    %948 = vmatprep.subr.mxu0 0.0
    %949 = vmatpush1.msra.mxu0 0.0
    %950 = vmatprep.subr.mxu0 0.0
    %951 = vmatpush1.msra.mxu0 0.0
    %952 = vmatprep.subr.mxu0 0.0
    %953 = vmatpush1.msra.mxu0 0.0
    %954 = vmatprep.subr.mxu0 0.0
    %955 = vmatpush1.msra.mxu0 0.0
    %956 = vmatprep.subr.mxu0 0.0
    %957 = vmatpush1.msra.mxu0 0.0
    %958 = vmatprep.subr.mxu0 0.0
    %959 = vmatpush1.msra.mxu0 0.0
    %960 = vmatprep.subr.mxu0 0.0
    %961 = vmatpush1.msra.mxu0 0.0
    %962 = vmatprep.subr.mxu0 0.0
    %963 = vmatpush1.msra.mxu0 0.0
    %964 = vmatprep.mubr.f32.mxu0 0.0
    %965 = vmatmul.mubr.f32.gmra.mrb[0].mxu0 %v898
    %v966 = vpop.f32.mrb[0].mxu0
    %v967 = vadd.f32 0.0, %v966
    %v968 = vpop.f32.mrb[0].mxu0
    %969 = vdwg.mxu0
    %v970 = vadd.f32 %v193, %v967
    %v971 = vxor.u32 %v970, 2147483648
    %v972 = vmul.f32 %v971, 1.442695
    %v973 = vpow.pop %v972
    %v974 = vadd.f32 %v973, 1.0
    %v975 = vrcp.pop %v974
    %v976 = vmul.f32 1.0, %v975
    %v977 = vtanh.pop %v970
    %v978 = vmul.f32 %v976, %v888
    %980 = vrot.lane.b32.xlu0 %v977, 80
    %v981 = vpop.permute.xlu0 %980
    %v983 = vmul.f32 %v976, %v981
    %985 = vrot.lane.b32.xlu0 %v983, 16
    %v986 = vpop.permute.xlu0 %985
    %v988 = vadd.f32 %v978, %v986
    %v989 = vtanh.pop %v988
    %991 = vrot.lane.b32.xlu0 %v989, 16
    %v992 = vpop.permute.xlu0 %991
    %v994 = vmul.f32 %v976, %v992
    %v995 = vld [vmem:[#allocation2] sm:$0xff]
    %v996 = vld [vmem:[#allocation2 + $0x8] sm:$0xff]
    %v997 = vld [vmem:[%s5] sm:$0x1]
    %v999 = vlaneseq
    %v1000 = vshrl.u32 %v999, 7
    %v1001 = vsub.s32 0, %v1000
    %v1002 = vrot.slane %v997, %v1001
    %1005 = vrot.lane.b32.xlu0 %v994, 96
    %v1006 = vpop.permute.xlu0 %1005
    %v1007 = vsel %vm196, %v1006, 0
    %1009 = vmatprep.subr.mxu0 0.0
    %1010 = vmatpush1.msra.mxu0 %v995
    %1011 = vmatprep.subr.mxu0 0.0
    %1012 = vmatpush1.msra.mxu0 %v996
    %1013 = vmatprep.subr.mxu0 0.0
    %1014 = vmatpush1.msra.mxu0 0.0
    %1015 = vmatprep.subr.mxu0 0.0
    %1016 = vmatpush1.msra.mxu0 0.0
    %1017 = vmatprep.subr.mxu0 0.0
    %1018 = vmatpush1.msra.mxu0 0.0
    %1019 = vmatprep.subr.mxu0 0.0
    %1020 = vmatpush1.msra.mxu0 0.0
    %1021 = vmatprep.subr.mxu0 0.0
    %1022 = vmatpush1.msra.mxu0 0.0
    %1023 = vmatprep.subr.mxu0 0.0
    %1024 = vmatpush1.msra.mxu0 0.0
    %1025 = vmatprep.subr.mxu0 0.0
    %1026 = vmatpush1.msra.mxu0 0.0
    %1027 = vmatprep.subr.mxu0 0.0
    %1028 = vmatpush1.msra.mxu0 0.0
    %1029 = vmatprep.subr.mxu0 0.0
    %1030 = vmatpush1.msra.mxu0 0.0
    %1031 = vmatprep.subr.mxu0 0.0
    %1032 = vmatpush1.msra.mxu0 0.0
    %1033 = vmatprep.subr.mxu0 0.0
    %1034 = vmatpush1.msra.mxu0 0.0
    %1035 = vmatprep.subr.mxu0 0.0
    %1036 = vmatpush1.msra.mxu0 0.0
    %1037 = vmatprep.subr.mxu0 0.0
    %1038 = vmatpush1.msra.mxu0 0.0
    %1039 = vmatprep.subr.mxu0 0.0
    %1040 = vmatpush1.msra.mxu0 0.0
    %1041 = vmatprep.subr.mxu0 0.0
    %1042 = vmatpush1.msra.mxu0 0.0
    %1043 = vmatprep.subr.mxu0 0.0
    %1044 = vmatpush1.msra.mxu0 0.0
    %1045 = vmatprep.subr.mxu0 0.0
    %1046 = vmatpush1.msra.mxu0 0.0
    %1047 = vmatprep.subr.mxu0 0.0
    %1048 = vmatpush1.msra.mxu0 0.0
    %1049 = vmatprep.subr.mxu0 0.0
    %1050 = vmatpush1.msra.mxu0 0.0
    %1051 = vmatprep.subr.mxu0 0.0
    %1052 = vmatpush1.msra.mxu0 0.0
    %1053 = vmatprep.subr.mxu0 0.0
    %1054 = vmatpush1.msra.mxu0 0.0
    %1055 = vmatprep.subr.mxu0 0.0
    %1056 = vmatpush1.msra.mxu0 0.0
    %1057 = vmatprep.subr.mxu0 0.0
    %1058 = vmatpush1.msra.mxu0 0.0
    %1059 = vmatprep.subr.mxu0 0.0
    %1060 = vmatpush1.msra.mxu0 0.0
    %1061 = vmatprep.subr.mxu0 0.0
    %1062 = vmatpush1.msra.mxu0 0.0
    %1063 = vmatprep.subr.mxu0 0.0
    %1064 = vmatpush1.msra.mxu0 0.0
    %1065 = vmatprep.subr.mxu0 0.0
    %1066 = vmatpush1.msra.mxu0 0.0
    %1067 = vmatprep.subr.mxu0 0.0
    %1068 = vmatpush1.msra.mxu0 0.0
    %1069 = vmatprep.subr.mxu0 0.0
    %1070 = vmatpush1.msra.mxu0 0.0
    %1071 = vmatprep.subr.mxu0 0.0
    %1072 = vmatpush1.msra.mxu0 0.0
    %1073 = vmatprep.mubr.f32.mxu0 0.0
    %1074 = vmatmul.mubr.f32.gmra.mrb[0].mxu0 %v298
    %v1075 = vpop.f32.mrb[0].mxu0
    %v1076 = vadd.f32 %v1002, %v1075
    %v1077 = vpop.f32.mrb[0].mxu0
    %1078 = vmatprep.mubr.f32.mxu0 0.0
    %1079 = vmatmul.mubr.f32.gmra.mrb[0].mxu0 %v398
    %v1080 = vpop.f32.mrb[0].mxu0
    %v1081 = vadd.f32 %v1002, %v1080
    %v1082 = vpop.f32.mrb[0].mxu0
    %1083 = vmatprep.mubr.f32.mxu0 0.0
    %1084 = vmatmul.mubr.f32.gmra.mrb[0].mxu0 %v498
    %v1085 = vpop.f32.mrb[0].mxu0
    %v1086 = vadd.f32 %v1002, %v1085
    %v1087 = vpop.f32.mrb[0].mxu0
    %1088 = vmatprep.mubr.f32.mxu0 0.0
    %1089 = vmatmul.mubr.f32.gmra.mrb[0].mxu0 %v598
    %v1090 = vpop.f32.mrb[0].mxu0
    %v1091 = vadd.f32 %v1002, %v1090
    %v1092 = vpop.f32.mrb[0].mxu0
    %1093 = vmatprep.mubr.f32.mxu0 0.0
    %1094 = vmatmul.mubr.f32.gmra.mrb[0].mxu0 %v698
    %v1095 = vpop.f32.mrb[0].mxu0
    %v1096 = vadd.f32 %v1002, %v1095
    %v1097 = vpop.f32.mrb[0].mxu0
    %1098 = vmatprep.mubr.f32.mxu0 0.0
    %1099 = vmatmul.mubr.f32.gmra.mrb[0].mxu0 %v798
    %v1100 = vpop.f32.mrb[0].mxu0
    %v1101 = vadd.f32 %v1002, %v1100
    %v1102 = vpop.f32.mrb[0].mxu0
    %1103 = vmatprep.mubr.f32.mxu0 0.0
    %1104 = vmatmul.mubr.f32.gmra.mrb[0].mxu0 %v898
    %v1105 = vpop.f32.mrb[0].mxu0
    %v1106 = vadd.f32 %v1002, %v1105
    %v1107 = vpop.f32.mrb[0].mxu0
    %1108 = vmatprep.mubr.f32.mxu0 0.0
    %1109 = vmatmul.mubr.f32.gmra.mrb[0].mxu0 %v1007
    %v1110 = vpop.f32.mrb[0].mxu0
    %v1111 = vadd.f32 %v1002, %v1110
    %v1112 = vpop.f32.mrb[0].mxu0
    %1113 = vdwg.mxu0
    %v1114 = vmax.f32 %v1076, 0.0
    %v1115 = vmax.f32 %v1081, 0.0
    %v1116 = vmax.f32 %v1086, 0.0
    %v1117 = vmax.f32 %v1091, 0.0
    %v1118 = vmax.f32 %v1096, 0.0
    %v1119 = vmax.f32 %v1101, 0.0
    %v1120 = vmax.f32 %v1106, 0.0
    %v1121 = vmax.f32 %v1111, 0.0
    %v1122 = vld [vmem:[%s6] sm:$0xff]
    %v1123 = vld [vmem:[%s6 + $0x8] sm:$0xff]
    %v1124 = vld [vmem:[%s6 + $0x10] sm:$0xff]
    %v1125 = vld [vmem:[%s6 + $0x18] sm:$0xff]
    %v1126 = vld [vmem:[%s6 + $0x20] sm:$0xff]
    %v1127 = vld [vmem:[%s6 + $0x28] sm:$0xff]
    %v1128 = vld [vmem:[%s6 + $0x30] sm:$0xff]
    %v1129 = vld [vmem:[%s6 + $0x38] sm:$0xff]
    %v1130 = vld [vmem:[%s7] sm:$0x1]
    %v1132 = vlaneseq
    %v1133 = vshrl.u32 %v1132, 7
    %v1134 = vsub.s32 0, %v1133
    %v1135 = vrot.slane %v1130, %v1134
    %vm1137 = vcmask 523264
    %v1139 = vsel %vm1137, %v1114, 0
    %v1142 = vsel %vm1137, %v1115, 0
    %v1145 = vsel %vm1137, %v1116, 0
    %v1148 = vsel %vm1137, %v1117, 0
    %v1151 = vsel %vm1137, %v1118, 0
    %v1154 = vsel %vm1137, %v1119, 0
    %v1157 = vsel %vm1137, %v1120, 0
    %v1160 = vsel %vm1137, %v1121, 0
    %1162 = vmatprep.subr.mxu0 0.0
    %1163 = vmatpush1.msra.mxu0 %v1122
    %1164 = vmatprep.subr.mxu0 0.0
    %1165 = vmatpush1.msra.mxu0 %v1123
    %1166 = vmatprep.subr.mxu0 0.0
    %1167 = vmatpush1.msra.mxu0 %v1124
    %1168 = vmatprep.subr.mxu0 0.0
    %1169 = vmatpush1.msra.mxu0 %v1125
    %1170 = vmatprep.subr.mxu0 0.0
    %1171 = vmatpush1.msra.mxu0 %v1126
    %1172 = vmatprep.subr.mxu0 0.0
    %1173 = vmatpush1.msra.mxu0 %v1127
    %1174 = vmatprep.subr.mxu0 0.0
    %1175 = vmatpush1.msra.mxu0 %v1128
    %1176 = vmatprep.subr.mxu0 0.0
    %1177 = vmatpush1.msra.mxu0 %v1129
    %1178 = vmatprep.subr.mxu0 0.0
    %1179 = vmatpush1.msra.mxu0 0.0
    %1180 = vmatprep.subr.mxu0 0.0
    %1181 = vmatpush1.msra.mxu0 0.0
    %1182 = vmatprep.subr.mxu0 0.0
    %1183 = vmatpush1.msra.mxu0 0.0
    %1184 = vmatprep.subr.mxu0 0.0
    %1185 = vmatpush1.msra.mxu0 0.0
    %1186 = vmatprep.subr.mxu0 0.0
    %1187 = vmatpush1.msra.mxu0 0.0
    %1188 = vmatprep.subr.mxu0 0.0
    %1189 = vmatpush1.msra.mxu0 0.0
    %1190 = vmatprep.subr.mxu0 0.0
    %1191 = vmatpush1.msra.mxu0 0.0
    %1192 = vmatprep.subr.mxu0 0.0
    %1193 = vmatpush1.msra.mxu0 0.0
    %1194 = vmatprep.subr.mxu0 0.0
    %1195 = vmatpush1.msra.mxu0 0.0
    %1196 = vmatprep.subr.mxu0 0.0
    %1197 = vmatpush1.msra.mxu0 0.0
    %1198 = vmatprep.subr.mxu0 0.0
    %1199 = vmatpush1.msra.mxu0 0.0
    %1200 = vmatprep.subr.mxu0 0.0
    %1201 = vmatpush1.msra.mxu0 0.0
    %1202 = vmatprep.subr.mxu0 0.0
    %1203 = vmatpush1.msra.mxu0 0.0
    %1204 = vmatprep.subr.mxu0 0.0
    %1205 = vmatpush1.msra.mxu0 0.0
    %1206 = vmatprep.subr.mxu0 0.0
    %1207 = vmatpush1.msra.mxu0 0.0
    %1208 = vmatprep.subr.mxu0 0.0
    %1209 = vmatpush1.msra.mxu0 0.0
    %1210 = vmatprep.subr.mxu0 0.0
    %1211 = vmatpush1.msra.mxu0 0.0
    %1212 = vmatprep.subr.mxu0 0.0
    %1213 = vmatpush1.msra.mxu0 0.0
    %1214 = vmatprep.subr.mxu0 0.0
    %1215 = vmatpush1.msra.mxu0 0.0
    %1216 = vmatprep.subr.mxu0 0.0
    %1217 = vmatpush1.msra.mxu0 0.0
    %1218 = vmatprep.subr.mxu0 0.0
    %1219 = vmatpush1.msra.mxu0 0.0
    %1220 = vmatprep.subr.mxu0 0.0
    %1221 = vmatpush1.msra.mxu0 0.0
    %1222 = vmatprep.subr.mxu0 0.0
    %1223 = vmatpush1.msra.mxu0 0.0
    %1224 = vmatprep.subr.mxu0 0.0
    %1225 = vmatpush1.msra.mxu0 0.0
    %1226 = vmatprep.mubr.f32.mxu0 0.0
    %1227 = vmatmul.mubr.f32.gmra.mrb[0].mxu0 %v1139
    %v1228 = vpop.f32.mrb[0].mxu0
    %v1229 = vadd.f32 %v1135, %v1228
    %v1230 = vpop.f32.mrb[0].mxu0
    %1231 = vmatprep.mubr.f32.mxu0 0.0
    %1232 = vmatmul.mubr.f32.gmra.mrb[0].mxu0 %v1142
    %v1233 = vpop.f32.mrb[0].mxu0
    %v1234 = vadd.f32 %v1135, %v1233
    %v1235 = vpop.f32.mrb[0].mxu0
    %1236 = vmatprep.mubr.f32.mxu0 0.0
    %1237 = vmatmul.mubr.f32.gmra.mrb[0].mxu0 %v1145
    %v1238 = vpop.f32.mrb[0].mxu0
    %v1239 = vadd.f32 %v1135, %v1238
    %v1240 = vpop.f32.mrb[0].mxu0
    %1241 = vmatprep.mubr.f32.mxu0 0.0
    %1242 = vmatmul.mubr.f32.gmra.mrb[0].mxu0 %v1148
    %v1243 = vpop.f32.mrb[0].mxu0
    %v1244 = vadd.f32 %v1135, %v1243
    %v1245 = vpop.f32.mrb[0].mxu0
    %1246 = vmatprep.mubr.f32.mxu0 0.0
    %1247 = vmatmul.mubr.f32.gmra.mrb[0].mxu0 %v1151
    %v1248 = vpop.f32.mrb[0].mxu0
    %v1249 = vadd.f32 %v1135, %v1248
    %v1250 = vpop.f32.mrb[0].mxu0
    %1251 = vmatprep.mubr.f32.mxu0 0.0
    %1252 = vmatmul.mubr.f32.gmra.mrb[0].mxu0 %v1154
    %v1253 = vpop.f32.mrb[0].mxu0
    %v1254 = vadd.f32 %v1135, %v1253
    %v1255 = vpop.f32.mrb[0].mxu0
    %1256 = vmatprep.mubr.f32.mxu0 0.0
    %1257 = vmatmul.mubr.f32.gmra.mrb[0].mxu0 %v1157
    %v1258 = vpop.f32.mrb[0].mxu0
    %v1259 = vadd.f32 %v1135, %v1258
    %v1260 = vpop.f32.mrb[0].mxu0
    %1261 = vmatprep.mubr.f32.mxu0 0.0
    %1262 = vmatmul.mubr.f32.gmra.mrb[0].mxu0 %v1160
    %v1263 = vpop.f32.mrb[0].mxu0
    %v1264 = vadd.f32 %v1135, %v1263
    %v1265 = vpop.f32.mrb[0].mxu0
    %1266 = vdwg.mxu0
    %1267 = vst [vmem:[#allocation5] sm:$0xff] %v1229
    %1268 = vst [vmem:[#allocation5 + $0x8] sm:$0xff] %v1234
    %1269 = vst [vmem:[#allocation5 + $0x10] sm:$0xff] %v1239
    %1270 = vst [vmem:[#allocation5 + $0x18] sm:$0xff] %v1244
    %1271 = vst [vmem:[#allocation5 + $0x20] sm:$0xff] %v1249
    %1272 = vst [vmem:[#allocation5 + $0x28] sm:$0xff] %v1254
    %1273 = vst [vmem:[#allocation5 + $0x30] sm:$0xff] %v1259
    %1274 = vst [vmem:[#allocation5 + $0x38] sm:$0xff] %v1264
    // Predicated region
    $region38: #{tpu_custom_call.1} parent=1 // pred_check
      _
    $region39: #{tpu_custom_call.1} parent=1 // pred_check_branch
      %1276 = sbr.rel (0) target = $region41
    $region40: #{tpu_custom_call.1} parent=1 // pred_region
      %s1278 = ssub.s32 1024, 1024
      %1279 = vsyncadd [#allocation4], %s1278
      %s1280 = sshll.u32 [#allocation5], 4
      %s1281 = int_to_ptr.vmem [resolvable:$true] %s1280
      %1286 = dma.vmem_to_hbm [thread:$0]  %s1281, 1024, %s8, [#allocation4], 128, 128, 8
    $region41: #{tpu_custom_call.1} parent=1 // pred_fallthru
      _
    // Predicated region
    $region42: #{tpu_custom_call.1} parent=1 // pred_check
      _
    $region43: #{tpu_custom_call.1} parent=1 // pred_check_branch
      %1288 = sbr.rel (0) target = $region45
    $region44: #{tpu_custom_call.1} parent=1 // pred_region
      %1289 = dma.done [#allocation4], 1024
    $region45: #{tpu_custom_call.1} parent=1 // pred_fallthru
      _
    %1290 = vsyncpa [#allocation3], 1
    %1291 = vsyncpa [#allocation4], 1

</llo_original>
